<compile_context>
chip_gen: v5e
topology: v5e:2x2
jax: 0.10.0
libtpu: 0.0.40
codegen_flags: <defaults>
</compile_context>

<pallas_src>
import jax
import jax.numpy as jnp
from jax.experimental import pallas as pl
from jax.experimental.pallas import tpu as pltpu


# ----------------------------- kernels ------------------------------------ #

def project_kernel(x_ref, w_ref, o_ref):
    """o[rows] = (x[rows] @ W) in f32 accumulation, stored as bf16."""
    o_ref[...] = jnp.dot(x_ref[...], w_ref[...],
                         preferred_element_type=jnp.float32).astype(o_ref.dtype)


def gcn_hop1_kernel(a_ref, xw_ref, b_ref, o_ref, acc_ref):
    """x1[rows] = normalize(A_hat[rows, :] @ XW1 + b1, dim=-1)  (bf16 out)."""
    k = pl.program_id(1)

    @pl.when(k == 0)
    def _():
        acc_ref[...] = jnp.zeros_like(acc_ref)

    acc_ref[...] += jnp.dot(a_ref[...], xw_ref[...],
                            preferred_element_type=jnp.float32)

    @pl.when(k == pl.num_programs(1) - 1)
    def _():
        h = acc_ref[...] + b_ref[...]
        # F.normalize(p=2, dim=-1, eps=1e-12):  h / max(||h||, 1e-12)
        #   == h * rsqrt(max(||h||^2, 1e-24))   (rsqrt runs on the EUP slot)
        ss = jnp.sum(h * h, axis=-1, keepdims=True)
        o_ref[...] = (h * jax.lax.rsqrt(jnp.maximum(ss, 1e-24))).astype(o_ref.dtype)


def gcn_hop2_kernel(a_ref, xw_ref, b_ref, xres_ref, o_ref, acc_ref):
    """out[rows] = A_hat[rows, :] @ XW2 + b2 + x[rows]."""
    k = pl.program_id(1)

    @pl.when(k == 0)
    def _():
        acc_ref[...] = jnp.zeros_like(acc_ref)

    acc_ref[...] += jnp.dot(a_ref[...], xw_ref[...],
                            preferred_element_type=jnp.float32)

    @pl.when(k == pl.num_programs(1) - 1)
    def _():
        o_ref[...] = (acc_ref[...] + b_ref[...] + xres_ref[...]).astype(o_ref.dtype)


def gcn_fused_kernel(a_ref, x_ref, w1_ref, b1_ref, w2_ref, b2_ref, o_ref):
    """Whole layer in a single VMEM-resident call (small-problem fast path)."""
    x = x_ref[...]                       # f32 (for exact residual)
    a = a_ref[...]                       # bf16
    xw1 = jnp.dot(x.astype(jnp.bfloat16), w1_ref[...],
                  preferred_element_type=jnp.float32)
    h1 = jnp.dot(a, xw1.astype(jnp.bfloat16),
                 preferred_element_type=jnp.float32) + b1_ref[...]
    ss = jnp.sum(h1 * h1, axis=-1, keepdims=True)
    x1 = h1 * jax.lax.rsqrt(jnp.maximum(ss, 1e-24))
    xw2 = jnp.dot(x1.astype(jnp.bfloat16), w2_ref[...],
                  preferred_element_type=jnp.float32)
    h2 = jnp.dot(a, xw2.astype(jnp.bfloat16),
                 preferred_element_type=jnp.float32)
    o_ref[...] = (h2 + b2_ref[...] + x).astype(o_ref.dtype)


# ------------------------------ helpers ------------------------------------ #

def _round_up(v, m):
    return ((v + m - 1) // m) * m


def _pad2d(m, rows, cols):
    r, c = m.shape
    if r == rows and c == cols:
        return m
    return jnp.zeros((rows, cols), m.dtype).at[:r, :c].set(m)


def _pick_tile(n_pad, requested):
    """Largest multiple of 128 that is <= requested and divides n_pad."""
    m = n_pad // 128
    t = max(1, min(max(requested, 128) // 128, m))
    while m % t:
        t -= 1
    return t * 128


def _vmem_limit_bytes(default=48 * 1024 * 1024):
    """~3/4 of physical VMEM (96 MiB on v5e/v6e, 48 MiB on v7x)."""
    try:
        cap = getattr(pltpu.get_tpu_info(), "vmem_capacity_bytes", None)
        if cap:
            return int(cap) * 3 // 4
    except Exception:
        pass
    return default


# ------------------------------ wrapper ------------------------------------ #

def gcn_layer(x, a_hat, w1, b1, w2, b2, *, row_tile=256, k_tile=1024,
              force_tiled=False, fused_vmem_budget=4 * 1024 * 1024):
    """Full GCNLayer forward. x: [N, D], a_hat: [N, N], w*: [D, D], b*: [1, D]."""
    n, d = x.shape
    dp = _round_up(d, 128)               # lane-dense feature axis
    n_pad = _round_up(n, 128)            # lane-dense / MXU-aligned A axis
    row_tile = _pick_tile(n_pad, row_tile)
    k_tile = _pick_tile(n_pad, k_tile)
    n_row_tiles = n_pad // row_tile
    n_k_tiles = n_pad // k_tile

    vmem_limit = _vmem_limit_bytes()

    # Zero padding is exact: padded A rows/cols are zero, padded feature
    # columns stay zero through both hops / the L2 norm / the residual, and
    # padded output rows are sliced off (zero A columns mean they never feed
    # real rows).
    x_p = _pad2d(x.astype(jnp.float32), n_pad, dp)
    x_bf = x_p.astype(jnp.bfloat16)
    a_p = _pad2d(a_hat.astype(jnp.float32), n_pad, n_pad).astype(jnp.bfloat16)
    w1_p = _pad2d(w1.astype(jnp.float32), dp, dp).astype(jnp.bfloat16)
    w2_p = _pad2d(w2.astype(jnp.float32), dp, dp).astype(jnp.bfloat16)
    b1_p = _pad2d(b1.reshape(1, -1).astype(jnp.float32), 1, dp)
    b2_p = _pad2d(b2.reshape(1, -1).astype(jnp.float32), 1, dp)

    # ------------- small-problem fast path: one fused, ungridded call -------
    fused_bytes = (a_p.size * 2 + x_p.size * 4 + x_bf.size * 2
                   + 2 * dp * dp * 2 + 6 * n_pad * dp * 4)
    if not force_tiled and fused_bytes <= fused_vmem_budget:
        out = pl.pallas_call(
            gcn_fused_kernel,
            out_shape=jax.ShapeDtypeStruct((n_pad, dp), jnp.float32),
            compiler_params=pltpu.CompilerParams(vmem_limit_bytes=vmem_limit),
            cost_estimate=pl.CostEstimate(
                flops=4 * n_pad * n_pad * dp + 4 * n_pad * dp * dp,
                transcendentals=n_pad,
                bytes_accessed=(a_p.size * 2 + 2 * x_p.size * 4
                                + 2 * dp * dp * 2 + 2 * dp * 4)),
        )(a_p, x_p, w1_p, b1_p, w2_p, b2_p)
        return out[:n, :d].astype(x.dtype)

    # ------------- tiled path: XW prologue + K-tiled A @ XW hops ------------
    cp_proj = pltpu.CompilerParams(dimension_semantics=("parallel",),
                                   vmem_limit_bytes=vmem_limit)
    cp_hop = pltpu.CompilerParams(dimension_semantics=("parallel", "arbitrary"),
                                  vmem_limit_bytes=vmem_limit)

    a_spec = pl.BlockSpec((row_tile, k_tile), lambda i, k: (i, k))
    xw_spec = pl.BlockSpec((k_tile, dp), lambda i, k: (k, 0))
    b_spec = pl.BlockSpec((1, dp), lambda i, k: (0, 0))
    row_spec = pl.BlockSpec((row_tile, dp), lambda i, k: (i, 0))
    acc_scratch = [pltpu.VMEM((row_tile, dp), jnp.float32)]

    proj_row_spec = pl.BlockSpec((row_tile, dp), lambda i: (i, 0))
    proj_w_spec = pl.BlockSpec((dp, dp), lambda i: (0, 0))
    proj_cost = pl.CostEstimate(flops=2 * n_pad * dp * dp, transcendentals=0,
                                bytes_accessed=2 * n_pad * dp * 2 + dp * dp * 2)

    def project(feat_bf16, w_bf16):
        return pl.pallas_call(
            project_kernel,
            out_shape=jax.ShapeDtypeStruct((n_pad, dp), jnp.bfloat16),
            grid=(n_row_tiles,),
            in_specs=[proj_row_spec, proj_w_spec],
            out_specs=proj_row_spec,
            compiler_params=cp_proj,
            cost_estimate=proj_cost,
        )(feat_bf16, w_bf16)

    hop_flops = 2 * n_pad * n_pad * dp
    hop_bytes = (a_p.size * 2                      # A_hat stream (bf16)
                 + n_row_tiles * n_pad * dp * 2    # XW re-read per row tile
                 + dp * 4 + n_pad * dp * 4)        # bias + output

    # Hop 1: x1 = normalize(A_hat @ XW1 + b1), emitted directly as bf16.
    xw1 = project(x_bf, w1_p)
    x1_bf = pl.pallas_call(
        gcn_hop1_kernel,
        out_shape=jax.ShapeDtypeStruct((n_pad, dp), jnp.bfloat16),
        grid=(n_row_tiles, n_k_tiles),
        in_specs=[a_spec, xw_spec, b_spec],
        out_specs=row_spec,
        scratch_shapes=acc_scratch,
        compiler_params=cp_hop,
        cost_estimate=pl.CostEstimate(flops=hop_flops, transcendentals=n_pad,
                                      bytes_accessed=hop_bytes),
    )(a_p, xw1, b1_p)

    # Hop 2: out = A_hat @ XW2 + b2 + x  (f32 residual / output).
    xw2 = project(x1_bf, w2_p)
    out = pl.pallas_call(
        gcn_hop2_kernel,
        out_shape=jax.ShapeDtypeStruct((n_pad, dp), jnp.float32),
        grid=(n_row_tiles, n_k_tiles),
        in_specs=[a_spec, xw_spec, b_spec, row_spec],
        out_specs=row_spec,
        scratch_shapes=acc_scratch,
        compiler_params=cp_hop,
        cost_estimate=pl.CostEstimate(flops=hop_flops, transcendentals=0,
                                      bytes_accessed=hop_bytes + n_pad * dp * 4),
    )(a_p, xw2, b2_p, x_p)

    return out[:n, :d].astype(x.dtype)


# --------------------------- plain-JAX glue -------------------------------- #

def build_normalized_adjacency(edge_index, num_nodes):
    """Dense D^-1/2 (A + I) D^-1/2, matching PyG gcn_norm (add_self_loops=True)."""
    src = edge_index[0]
    dst = edge_index[1]
    a = jnp.zeros((num_nodes, num_nodes), jnp.float32)
    a = a.at[dst, src].add(1.0)                    # source -> target aggregation
    a = a + jnp.eye(num_nodes, dtype=jnp.float32)  # self loops, weight 1
    deg = jnp.sum(a, axis=1)
    deg_inv_sqrt = jnp.where(deg > 0, 1.0 / jnp.sqrt(deg), 0.0)
    return deg_inv_sqrt[:, None] * a * deg_inv_sqrt[None, :]


def gcn_layer_reference(x, a_hat, w1, b1, w2, b2):
    x1 = a_hat @ (x @ w1) + b1
    nrm = jnp.sqrt(jnp.sum(x1 * x1, axis=-1, keepdims=True))
    x1 = x1 / jnp.maximum(nrm, 1e-12)
    x2 = a_hat @ (x1 @ w2) + b2
    return x2 + x


def glorot_uniform(key, fan_in, fan_out):
    limit = (6.0 / (fan_in + fan_out)) ** 0.5
    return jax.random.uniform(
        key, (fan_in, fan_out), jnp.float32, minval=-limit, maxval=limit
    )


if __name__ == "__main__":
    N = 200         # number of graph nodes (pads to 256)
    D = 32          # input_size == output_size (enforced by the module)
    E = 400         # number of edges

    key = jax.random.PRNGKey(0)
    kx, ke, kw1, kw2 = jax.random.split(key, 4)

    # Node features [N, D].
    x = jax.random.normal(kx, (N, D), jnp.float32)

    # Integer edge_index [2, E]  (the module's torch.rand placeholder is not a
    # valid index tensor; a deterministic random integer edge set is used).
    edge_index = jax.random.randint(ke, (2, E), 0, N, jnp.int32)

    # GCNConv parameters: glorot weights [D, D], zero bias (PyG defaults).
    w1 = glorot_uniform(kw1, D, D)
    b1 = jnp.zeros((1, D), jnp.float32)
    w2 = glorot_uniform(kw2, D, D)
    b2 = jnp.zeros((1, D), jnp.float32)

    a_hat = build_normalized_adjacency(edge_index, N)
    ref = gcn_layer_reference(x, a_hat, w1, b1, w2, b2)

    # Small-problem fused fast path (one ungridded call).
    out_fused = jax.block_until_ready(gcn_layer(x, a_hat, w1, b1, w2, b2))
    # Tiled path: XW prologue + K-tiled hops, grid = (2 row tiles, 2 K tiles).
    out_tiled = jax.block_until_ready(
        gcn_layer(x, a_hat, w1, b1, w2, b2, row_tile=128, k_tile=128,
                  force_tiled=True))

    for out in (out_fused, out_tiled):
        assert out.shape == (N, D) and out.dtype == jnp.float32
        assert bool(jnp.allclose(out, ref, rtol=5e-2, atol=5e-2))
    print("KERNEL_OK")
</pallas_src>

<mosaic_0001>
module attributes {stable_mosaic.version = 11 : i64} {
  func.func @gcn_fused_kernel(%arg0: memref<256x256xbf16, #tpu.memory_space<vmem>>, %arg1: memref<256x128xf32, #tpu.memory_space<vmem>>, %arg2: memref<128x128xbf16, #tpu.memory_space<vmem>>, %arg3: memref<1x128xf32, #tpu.memory_space<vmem>>, %arg4: memref<128x128xbf16, #tpu.memory_space<vmem>>, %arg5: memref<1x128xf32, #tpu.memory_space<vmem>>, %arg6: memref<256x128xf32, #tpu.memory_space<vmem>>) attributes {dimension_semantics = [], scalar_prefetch = 0 : i64, scratch_operands = 0 : i64, tpu.core_type = #tpu.core_type<tc>} {
    %c0 = arith.constant 0 : index
    %c0_0 = arith.constant 0 : index
    %0 = vector.load %arg1[%c0, %c0_0] : memref<256x128xf32, #tpu.memory_space<vmem>>, vector<256x128xf32>
    %c0_1 = arith.constant 0 : index
    %c0_2 = arith.constant 0 : index
    %1 = vector.load %arg0[%c0_1, %c0_2] : memref<256x256xbf16, #tpu.memory_space<vmem>>, vector<256x256xbf16>
    %2 = arith.truncf %0 : vector<256x128xf32> to vector<256x128xbf16>
    %c0_3 = arith.constant 0 : index
    %c0_4 = arith.constant 0 : index
    %3 = vector.load %arg2[%c0_3, %c0_4] : memref<128x128xbf16, #tpu.memory_space<vmem>>, vector<128x128xbf16>
    %cst = arith.constant dense<0.000000e+00> : vector<256x128xf32>
    %4 = tpu.matmul %2, %3, %cst {dimension_numbers = #tpu.dot_dimension_numbers<[1], [0], [0], [1], [0, 0, 1, 1], [], []>} : vector<256x128xbf16>, vector<128x128xbf16>, vector<256x128xf32> -> vector<256x128xf32>
    %5 = arith.truncf %4 : vector<256x128xf32> to vector<256x128xbf16>
    %cst_5 = arith.constant dense<0.000000e+00> : vector<256x128xf32>
    %6 = tpu.matmul %1, %5, %cst_5 {dimension_numbers = #tpu.dot_dimension_numbers<[1], [0], [0], [1], [0, 0, 1, 1], [], []>} : vector<256x256xbf16>, vector<256x128xbf16>, vector<256x128xf32> -> vector<256x128xf32>
    %c0_6 = arith.constant 0 : index
    %c0_7 = arith.constant 0 : index
    %7 = vector.load %arg3[%c0_6, %c0_7] : memref<1x128xf32, #tpu.memory_space<vmem>>, vector<1x128xf32>
    %8 = vector.broadcast %7 : vector<1x128xf32> to vector<256x128xf32>
    %9 = arith.addf %6, %8 : vector<256x128xf32>
    %10 = arith.mulf %9, %9 : vector<256x128xf32>
    %cst_8 = arith.constant dense<0.000000e+00> : vector<256xf32>
    %11 = vector.multi_reduction <add>, %10, %cst_8 [1] : vector<256x128xf32> to vector<256xf32>
    %12 = vector.shape_cast %11 : vector<256xf32> to vector<256x1xf32>
    %cst_9 = arith.constant 1.000000e-24 : f32
    %13 = vector.broadcast %cst_9 : f32 to vector<256x1xf32>
    %14 = arith.maximumf %12, %13 : vector<256x1xf32>
    %15 = math.rsqrt %14 : vector<256x1xf32>
    %16 = vector.broadcast %15 : vector<256x1xf32> to vector<256x128xf32>
    %17 = arith.mulf %9, %16 : vector<256x128xf32>
    %18 = arith.truncf %17 : vector<256x128xf32> to vector<256x128xbf16>
    %c0_10 = arith.constant 0 : index
    %c0_11 = arith.constant 0 : index
    %19 = vector.load %arg4[%c0_10, %c0_11] : memref<128x128xbf16, #tpu.memory_space<vmem>>, vector<128x128xbf16>
    %cst_12 = arith.constant dense<0.000000e+00> : vector<256x128xf32>
    %20 = tpu.matmul %18, %19, %cst_12 {dimension_numbers = #tpu.dot_dimension_numbers<[1], [0], [0], [1], [0, 0, 1, 1], [], []>} : vector<256x128xbf16>, vector<128x128xbf16>, vector<256x128xf32> -> vector<256x128xf32>
    %21 = arith.truncf %20 : vector<256x128xf32> to vector<256x128xbf16>
    %cst_13 = arith.constant dense<0.000000e+00> : vector<256x128xf32>
    %22 = tpu.matmul %1, %21, %cst_13 {dimension_numbers = #tpu.dot_dimension_numbers<[1], [0], [0], [1], [0, 0, 1, 1], [], []>} : vector<256x256xbf16>, vector<256x128xbf16>, vector<256x128xf32> -> vector<256x128xf32>
    %c0_14 = arith.constant 0 : index
    %c0_15 = arith.constant 0 : index
    %23 = vector.load %arg5[%c0_14, %c0_15] : memref<1x128xf32, #tpu.memory_space<vmem>>, vector<1x128xf32>
    %24 = vector.broadcast %23 : vector<1x128xf32> to vector<256x128xf32>
    %25 = arith.addf %22, %24 : vector<256x128xf32>
    %26 = arith.addf %25, %0 : vector<256x128xf32>
    %c0_16 = arith.constant 0 : index
    %c0_17 = arith.constant 0 : index
    %27 = vector.load %arg6[%c0_16, %c0_17] : memref<256x128xf32, #tpu.memory_space<vmem>>, vector<256x128xf32>
    tpu.vector_store %arg6[%c0_16, %c0_17], %26 {strides = array<i32>} : memref<256x128xf32, #tpu.memory_space<vmem>>, vector<256x128xf32>,
    return
  }
}

</mosaic_0001>

<llo_original>
// kernel: tpu_custom_call.1
$region0: #{tpu_custom_call.1}
  #allocation0 [shape = 'u32[]', space=smem, size = 0x4, offset = 0x4, fixed_abs, tag = 'smem constant byte address 0x4 - core index']
  #allocation1 [shape = 'u32[72,128]{1,0:T(1,128)}', space=vmem, size = 0x9000, scoped, tag = 'internal scratch']
  %s0 = inlined_call_operand.hbm [shape: bf16[256,256], index: 0, kind: input, shape index: {}]
  %s1 = inlined_call_operand.hbm [shape: f32[256,128], index: 1, kind: input, shape index: {}]
  %s2 = inlined_call_operand.hbm [shape: bf16[128,128], index: 2, kind: input, shape index: {}]
  %s3 = inlined_call_operand.vmem [shape: f32[1,128], index: 3, kind: input, shape index: {}]
  %s4 = inlined_call_operand.hbm [shape: bf16[128,128], index: 4, kind: input, shape index: {}]
  %s5 = inlined_call_operand.vmem [shape: f32[1,128], index: 5, kind: input, shape index: {}]
  %s6 = inlined_call_operand.hbm [shape: f32[256,128], index: 6, kind: output, shape index: {}]
  %s7 = sld [smem:[#allocation0]]
  $region50: #{tpu_custom_call.1} parent=0
    _
  %s9 = ssub.s32 1, %s7
  %s10 = scalar_select 0, %s9, %s7
  $region1: #{tpu_custom_call.1} parent=0
    #allocation2 [shape = 'u8[131072]{0}', space=vmem, size = 0x20000, scoped, tag = 'input window, operand 0, single buffered']
    #allocation3 [shape = 's32[1]{0}', space=sflag, size = 0x4, scoped, tag = 'scoped memory for tpu_custom_call.1']
    #allocation4 [shape = 's32[1]{0}', space=sflag, size = 0x4, scoped, tag = 'scoped memory for tpu_custom_call.1']
    #allocation5 [shape = 'u8[131072]{0}', space=vmem, size = 0x20000, scoped, tag = 'input window, operand 1, single buffered']
    #allocation6 [shape = 's32[1]{0}', space=sflag, size = 0x4, scoped, tag = 'scoped memory for tpu_custom_call.1']
    #allocation7 [shape = 'u8[32768]{0}', space=vmem, size = 0x8000, scoped, tag = 'input window, operand 2, single buffered']
    #allocation8 [shape = 'u8[32768]{0}', space=vmem, size = 0x8000, scoped, tag = 'input window, operand 4, single buffered']
    #allocation9 [shape = 's32[1]{0}', space=sflag, size = 0x4, scoped, tag = 'scoped memory for tpu_custom_call.1']
    #allocation10 [shape = 'u8[131072]{0}', space=vmem, size = 0x20000, scoped, tag = 'output window, operand 0, single buffered']
    %11 = vsyncpa [#allocation3], 0
    %12 = vsyncpa [#allocation6], 0
    %13 = vsyncpa [#allocation9], 0
    %14 = vsyncpa [#allocation4], 0
    // Predicated region
    $region2: #{tpu_custom_call.1} parent=1 // pred_check
      _
    $region3: #{tpu_custom_call.1} parent=1 // pred_check_branch
      %16 = sbr.rel (0) target = $region5
    $region4: #{tpu_custom_call.1} parent=1 // pred_region
      %18 = vsyncadd [#allocation3], 0
      %s19 = sshll.u32 %s0, 4
      %s20 = int_to_ptr.hbm [resolvable:$true] %s19
      %s21 = sshll.u32 [#allocation2], 4
      %s22 = int_to_ptr.vmem [resolvable:$true] %s21
      %27 = dma.hbm_to_vmem [thread:$0]  %s20, 4096, %s22, [#allocation3], 128, 128, 8
    $region5: #{tpu_custom_call.1} parent=1 // pred_fallthru
      _
    // Predicated region
    $region6: #{tpu_custom_call.1} parent=1 // pred_check
      _
    $region7: #{tpu_custom_call.1} parent=1 // pred_check_branch
      %29 = sbr.rel (0) target = $region9
    $region8: #{tpu_custom_call.1} parent=1 // pred_region
      %31 = vsyncadd [#allocation6], 0
      %s32 = sshll.u32 %s1, 4
      %s33 = int_to_ptr.hbm [resolvable:$true] %s32
      %s34 = sshll.u32 [#allocation5], 4
      %s35 = int_to_ptr.vmem [resolvable:$true] %s34
      %40 = dma.hbm_to_vmem [thread:$0]  %s33, 4096, %s35, [#allocation6], 128, 128, 8
    $region9: #{tpu_custom_call.1} parent=1 // pred_fallthru
      _
    // Predicated region
    $region10: #{tpu_custom_call.1} parent=1 // pred_check
      _
    $region11: #{tpu_custom_call.1} parent=1 // pred_check_branch
      %42 = sbr.rel (0) target = $region13
    $region12: #{tpu_custom_call.1} parent=1 // pred_region
      %44 = vsyncadd [#allocation6], 0
      %s45 = sshll.u32 %s2, 4
      %s46 = int_to_ptr.hbm [resolvable:$true] %s45
      %s47 = sshll.u32 [#allocation7], 4
      %s48 = int_to_ptr.vmem [resolvable:$true] %s47
      %53 = dma.hbm_to_vmem [thread:$0]  %s46, 1024, %s48, [#allocation6], 64, 64, 4
    $region13: #{tpu_custom_call.1} parent=1 // pred_fallthru
      _
    // Predicated region
    $region14: #{tpu_custom_call.1} parent=1 // pred_check
      _
    $region15: #{tpu_custom_call.1} parent=1 // pred_check_branch
      %55 = sbr.rel (0) target = $region17
    $region16: #{tpu_custom_call.1} parent=1 // pred_region
      _
    $region17: #{tpu_custom_call.1} parent=1 // pred_fallthru
      _
    // Predicated region
    $region18: #{tpu_custom_call.1} parent=1 // pred_check
      _
    $region19: #{tpu_custom_call.1} parent=1 // pred_check_branch
      %57 = sbr.rel (0) target = $region21
    $region20: #{tpu_custom_call.1} parent=1 // pred_region
      %59 = vsyncadd [#allocation9], 0
      %s60 = sshll.u32 %s4, 4
      %s61 = int_to_ptr.hbm [resolvable:$true] %s60
      %s62 = sshll.u32 [#allocation8], 4
      %s63 = int_to_ptr.vmem [resolvable:$true] %s62
      %68 = dma.hbm_to_vmem [thread:$0]  %s61, 1024, %s63, [#allocation9], 64, 64, 4
    $region21: #{tpu_custom_call.1} parent=1 // pred_fallthru
      _
    // Predicated region
    $region22: #{tpu_custom_call.1} parent=1 // pred_check
      _
    $region23: #{tpu_custom_call.1} parent=1 // pred_check_branch
      %70 = sbr.rel (0) target = $region25
    $region24: #{tpu_custom_call.1} parent=1 // pred_region
      _
    $region25: #{tpu_custom_call.1} parent=1 // pred_fallthru
      _
    // Predicated region
    $region26: #{tpu_custom_call.1} parent=1 // pred_check
      _
    $region27: #{tpu_custom_call.1} parent=1 // pred_check_branch
      %72 = sbr.rel (0) target = $region29
    $region28: #{tpu_custom_call.1} parent=1 // pred_region
      %74 = dma.done [#allocation3], 4096
    $region29: #{tpu_custom_call.1} parent=1 // pred_fallthru
      _
    // Predicated region
    $region30: #{tpu_custom_call.1} parent=1 // pred_check
      _
    $region31: #{tpu_custom_call.1} parent=1 // pred_check_branch
      %76 = sbr.rel (0) target = $region33
    $region32: #{tpu_custom_call.1} parent=1 // pred_region
      %78 = dma.done [#allocation6], 4096
    $region33: #{tpu_custom_call.1} parent=1 // pred_fallthru
      _
    // Predicated region
    $region34: #{tpu_custom_call.1} parent=1 // pred_check
      _
    $region35: #{tpu_custom_call.1} parent=1 // pred_check_branch
      %80 = sbr.rel (0) target = $region37
    $region36: #{tpu_custom_call.1} parent=1 // pred_region
      %82 = dma.done [#allocation6], 1024
    $region37: #{tpu_custom_call.1} parent=1 // pred_fallthru
      _
    // Predicated region
    $region38: #{tpu_custom_call.1} parent=1 // pred_check
      _
    $region39: #{tpu_custom_call.1} parent=1 // pred_check_branch
      %84 = sbr.rel (0) target = $region41
    $region40: #{tpu_custom_call.1} parent=1 // pred_region
      %86 = dma.done [#allocation9], 1024
    $region41: #{tpu_custom_call.1} parent=1 // pred_fallthru
      _
    %v87 = vld [vmem:[#allocation5] sm:$0xff]
    %v88 = vld [vmem:[#allocation5 + $0x8] sm:$0xff]
    %v89 = vld [vmem:[#allocation5 + $0x10] sm:$0xff]
    %v90 = vld [vmem:[#allocation5 + $0x18] sm:$0xff]
    %v91 = vld [vmem:[#allocation5 + $0x20] sm:$0xff]
    %v92 = vld [vmem:[#allocation5 + $0x28] sm:$0xff]
    %v93 = vld [vmem:[#allocation5 + $0x30] sm:$0xff]
    %v94 = vld [vmem:[#allocation5 + $0x38] sm:$0xff]
    %v95 = vld [vmem:[#allocation5 + $0x40] sm:$0xff]
    %v96 = vld [vmem:[#allocation5 + $0x48] sm:$0xff]
    %v97 = vld [vmem:[#allocation5 + $0x50] sm:$0xff]
    %v98 = vld [vmem:[#allocation5 + $0x58] sm:$0xff]
    %v99 = vld [vmem:[#allocation5 + $0x60] sm:$0xff]
    %v100 = vld [vmem:[#allocation5 + $0x68] sm:$0xff]
    %v101 = vld [vmem:[#allocation5 + $0x70] sm:$0xff]
    %v102 = vld [vmem:[#allocation5 + $0x78] sm:$0xff]
    %v103 = vld [vmem:[#allocation5 + $0x80] sm:$0xff]
    %v104 = vld [vmem:[#allocation5 + $0x88] sm:$0xff]
    %v105 = vld [vmem:[#allocation5 + $0x90] sm:$0xff]
    %v106 = vld [vmem:[#allocation5 + $0x98] sm:$0xff]
    %v107 = vld [vmem:[#allocation5 + $0xa0] sm:$0xff]
    %v108 = vld [vmem:[#allocation5 + $0xa8] sm:$0xff]
    %v109 = vld [vmem:[#allocation5 + $0xb0] sm:$0xff]
    %v110 = vld [vmem:[#allocation5 + $0xb8] sm:$0xff]
    %v111 = vld [vmem:[#allocation5 + $0xc0] sm:$0xff]
    %v112 = vld [vmem:[#allocation5 + $0xc8] sm:$0xff]
    %v113 = vld [vmem:[#allocation5 + $0xd0] sm:$0xff]
    %v114 = vld [vmem:[#allocation5 + $0xd8] sm:$0xff]
    %v115 = vld [vmem:[#allocation5 + $0xe0] sm:$0xff]
    %v116 = vld [vmem:[#allocation5 + $0xe8] sm:$0xff]
    %v117 = vld [vmem:[#allocation5 + $0xf0] sm:$0xff]
    %v118 = vld [vmem:[#allocation5 + $0xf8] sm:$0xff]
    %v119 = vld [vmem:[#allocation2] sm:$0xff]
    %v120 = vld [vmem:[#allocation2 + $0x8] sm:$0xff]
    %v121 = vld [vmem:[#allocation2 + $0x10] sm:$0xff]
    %v122 = vld [vmem:[#allocation2 + $0x18] sm:$0xff]
    %v123 = vld [vmem:[#allocation2 + $0x20] sm:$0xff]
    %v124 = vld [vmem:[#allocation2 + $0x28] sm:$0xff]
    %v125 = vld [vmem:[#allocation2 + $0x30] sm:$0xff]
    %v126 = vld [vmem:[#allocation2 + $0x38] sm:$0xff]
    %v127 = vld [vmem:[#allocation2 + $0x40] sm:$0xff]
    %v128 = vld [vmem:[#allocation2 + $0x48] sm:$0xff]
    %v129 = vld [vmem:[#allocation2 + $0x50] sm:$0xff]
    %v130 = vld [vmem:[#allocation2 + $0x58] sm:$0xff]
    %v131 = vld [vmem:[#allocation2 + $0x60] sm:$0xff]
    %v132 = vld [vmem:[#allocation2 + $0x68] sm:$0xff]
    %v133 = vld [vmem:[#allocation2 + $0x70] sm:$0xff]
    %v134 = vld [vmem:[#allocation2 + $0x78] sm:$0xff]
    %v135 = vld [vmem:[#allocation2 + $0x80] sm:$0xff]
    %v136 = vld [vmem:[#allocation2 + $0x88] sm:$0xff]
    %v137 = vld [vmem:[#allocation2 + $0x90] sm:$0xff]
    %v138 = vld [vmem:[#allocation2 + $0x98] sm:$0xff]
    %v139 = vld [vmem:[#allocation2 + $0xa0] sm:$0xff]
    %v140 = vld [vmem:[#allocation2 + $0xa8] sm:$0xff]
    %v141 = vld [vmem:[#allocation2 + $0xb0] sm:$0xff]
    %v142 = vld [vmem:[#allocation2 + $0xb8] sm:$0xff]
    %v143 = vld [vmem:[#allocation2 + $0xc0] sm:$0xff]
    %v144 = vld [vmem:[#allocation2 + $0xc8] sm:$0xff]
    %v145 = vld [vmem:[#allocation2 + $0xd0] sm:$0xff]
    %v146 = vld [vmem:[#allocation2 + $0xd8] sm:$0xff]
    %v147 = vld [vmem:[#allocation2 + $0xe0] sm:$0xff]
    %v148 = vld [vmem:[#allocation2 + $0xe8] sm:$0xff]
    %v149 = vld [vmem:[#allocation2 + $0xf0] sm:$0xff]
    %v150 = vld [vmem:[#allocation2 + $0xf8] sm:$0xff]
    %v151 = vpack.c.bf16 %v88, %v87
    %v152 = vpack.c.bf16 %v90, %v89
    %v153 = vpack.c.bf16 %v92, %v91
    %v154 = vpack.c.bf16 %v94, %v93
    %v155 = vpack.c.bf16 %v96, %v95
    %v156 = vpack.c.bf16 %v98, %v97
    %v157 = vpack.c.bf16 %v100, %v99
    %v158 = vpack.c.bf16 %v102, %v101
    %v159 = vpack.c.bf16 %v104, %v103
    %v160 = vpack.c.bf16 %v106, %v105
    %v161 = vpack.c.bf16 %v108, %v107
    %v162 = vpack.c.bf16 %v110, %v109
    %v163 = vpack.c.bf16 %v112, %v111
    %v164 = vpack.c.bf16 %v114, %v113
    %v165 = vpack.c.bf16 %v116, %v115
    %v166 = vpack.c.bf16 %v118, %v117
    %v167 = vld [vmem:[#allocation7] sm:$0xf]
    %v168 = vld [vmem:[#allocation7 + $0x4] sm:$0xf]
    %v169 = vld [vmem:[#allocation7 + $0x8] sm:$0xf]
    %v170 = vld [vmem:[#allocation7 + $0xc] sm:$0xf]
    %v171 = vld [vmem:[#allocation7 + $0x10] sm:$0xf]
    %v172 = vld [vmem:[#allocation7 + $0x14] sm:$0xf]
    %v173 = vld [vmem:[#allocation7 + $0x18] sm:$0xf]
    %v174 = vld [vmem:[#allocation7 + $0x1c] sm:$0xf]
    %v175 = vld [vmem:[#allocation7 + $0x20] sm:$0xf]
    %v176 = vld [vmem:[#allocation7 + $0x24] sm:$0xf]
    %v177 = vld [vmem:[#allocation7 + $0x28] sm:$0xf]
    %v178 = vld [vmem:[#allocation7 + $0x2c] sm:$0xf]
    %v179 = vld [vmem:[#allocation7 + $0x30] sm:$0xf]
    %v180 = vld [vmem:[#allocation7 + $0x34] sm:$0xf]
    %v181 = vld [vmem:[#allocation7 + $0x38] sm:$0xf]
    %v182 = vld [vmem:[#allocation7 + $0x3c] sm:$0xf]
    %v199 = vunpack.c.l.b16 %v167
    %v200 = vunpack.c.l.b16 %v168
    %v201 = vunpack.c.l.b16 %v169
    %v202 = vunpack.c.l.b16 %v170
    %v203 = vunpack.c.l.b16 %v171
    %v204 = vunpack.c.l.b16 %v172
    %v205 = vunpack.c.l.b16 %v173
    %v206 = vunpack.c.l.b16 %v174
    %v207 = vunpack.c.l.b16 %v175
    %v208 = vunpack.c.l.b16 %v176
    %v209 = vunpack.c.l.b16 %v177
    %v210 = vunpack.c.l.b16 %v178
    %v211 = vunpack.c.l.b16 %v179
    %v212 = vunpack.c.l.b16 %v180
    %v213 = vunpack.c.l.b16 %v181
    %v214 = vunpack.c.l.b16 %v182
    %v215 = vpack.c.b16 %v200, %v199
    %v216 = vpack.c.b16 %v202, %v201
    %v217 = vpack.c.b16 %v204, %v203
    %v218 = vpack.c.b16 %v206, %v205
    %v219 = vpack.c.b16 %v208, %v207
    %v220 = vpack.c.b16 %v210, %v209
    %v221 = vpack.c.b16 %v212, %v211
    %v222 = vpack.c.b16 %v214, %v213
    %231 = vmatpush.bf16.msra.mxu0 %v222
    %232 = vmatpush.bf16.msra.mxu0 %v221
    %233 = vmatpush.bf16.msra.mxu0 %v220
    %234 = vmatpush.bf16.msra.mxu0 %v219
    %235 = vmatpush.bf16.msra.mxu0 %v218
    %236 = vmatpush.bf16.msra.mxu0 %v217
    %237 = vmatpush.bf16.msra.mxu0 %v216
    %238 = vmatpush.bf16.msra.mxu0 %v215
    %239 = vmatmul.bf16.gmra.mxu0 %v151
    %v240 = vpop.f32.mrf.mxu0
    %v241 = vadd.f32 0.0, %v240
    %v242 = vpop.f32.mrf.mxu0
    %v243 = vadd.f32 0.0, %v242
    %244 = vmatmul.bf16.gmra.mxu0 %v152
    %v245 = vpop.f32.mrf.mxu0
    %v246 = vadd.f32 0.0, %v245
    %v247 = vpop.f32.mrf.mxu0
    %v248 = vadd.f32 0.0, %v247
    %249 = vmatmul.bf16.gmra.mxu0 %v153
    %v250 = vpop.f32.mrf.mxu0
    %v251 = vadd.f32 0.0, %v250
    %v252 = vpop.f32.mrf.mxu0
    %v253 = vadd.f32 0.0, %v252
    %254 = vmatmul.bf16.gmra.mxu0 %v154
    %v255 = vpop.f32.mrf.mxu0
    %v256 = vadd.f32 0.0, %v255
    %v257 = vpop.f32.mrf.mxu0
    %v258 = vadd.f32 0.0, %v257
    %259 = vmatmul.bf16.gmra.mxu0 %v155
    %v260 = vpop.f32.mrf.mxu0
    %v261 = vadd.f32 0.0, %v260
    %v262 = vpop.f32.mrf.mxu0
    %v263 = vadd.f32 0.0, %v262
    %264 = vmatmul.bf16.gmra.mxu0 %v156
    %v265 = vpop.f32.mrf.mxu0
    %v266 = vadd.f32 0.0, %v265
    %v267 = vpop.f32.mrf.mxu0
    %v268 = vadd.f32 0.0, %v267
    %269 = vmatmul.bf16.gmra.mxu0 %v157
    %v270 = vpop.f32.mrf.mxu0
    %v271 = vadd.f32 0.0, %v270
    %v272 = vpop.f32.mrf.mxu0
    %v273 = vadd.f32 0.0, %v272
    %274 = vmatmul.bf16.gmra.mxu0 %v158
    %v275 = vpop.f32.mrf.mxu0
    %v276 = vadd.f32 0.0, %v275
    %v277 = vpop.f32.mrf.mxu0
    %v278 = vadd.f32 0.0, %v277
    %279 = vmatmul.bf16.gmra.mxu0 %v159
    %v280 = vpop.f32.mrf.mxu0
    %v281 = vadd.f32 0.0, %v280
    %v282 = vpop.f32.mrf.mxu0
    %v283 = vadd.f32 0.0, %v282
    %284 = vmatmul.bf16.gmra.mxu0 %v160
    %v285 = vpop.f32.mrf.mxu0
    %v286 = vadd.f32 0.0, %v285
    %v287 = vpop.f32.mrf.mxu0
    %v288 = vadd.f32 0.0, %v287
    %289 = vmatmul.bf16.gmra.mxu0 %v161
    %v290 = vpop.f32.mrf.mxu0
    %v291 = vadd.f32 0.0, %v290
    %v292 = vpop.f32.mrf.mxu0
    %v293 = vadd.f32 0.0, %v292
    %294 = vmatmul.bf16.gmra.mxu0 %v162
    %v295 = vpop.f32.mrf.mxu0
    %v296 = vadd.f32 0.0, %v295
    %v297 = vpop.f32.mrf.mxu0
    %v298 = vadd.f32 0.0, %v297
    %299 = vmatmul.bf16.gmra.mxu0 %v163
    %v300 = vpop.f32.mrf.mxu0
    %v301 = vadd.f32 0.0, %v300
    %v302 = vpop.f32.mrf.mxu0
    %v303 = vadd.f32 0.0, %v302
    %304 = vmatmul.bf16.gmra.mxu0 %v164
    %v305 = vpop.f32.mrf.mxu0
    %v306 = vadd.f32 0.0, %v305
    %v307 = vpop.f32.mrf.mxu0
    %v308 = vadd.f32 0.0, %v307
    %309 = vmatmul.bf16.gmra.mxu0 %v165
    %v310 = vpop.f32.mrf.mxu0
    %v311 = vadd.f32 0.0, %v310
    %v312 = vpop.f32.mrf.mxu0
    %v313 = vadd.f32 0.0, %v312
    %314 = vmatmul.bf16.gmra.mxu0 %v166
    %v315 = vpop.f32.mrf.mxu0
    %v316 = vadd.f32 0.0, %v315
    %v317 = vpop.f32.mrf.mxu0
    %v318 = vadd.f32 0.0, %v317
    %319 = vdwg.mxu0
    %v320 = vpack.c.bf16 %v243, %v241
    %v321 = vpack.c.bf16 %v248, %v246
    %v322 = vpack.c.bf16 %v253, %v251
    %v323 = vpack.c.bf16 %v258, %v256
    %v324 = vpack.c.bf16 %v263, %v261
    %v325 = vpack.c.bf16 %v268, %v266
    %v326 = vpack.c.bf16 %v273, %v271
    %v327 = vpack.c.bf16 %v278, %v276
    %v328 = vpack.c.bf16 %v283, %v281
    %v329 = vpack.c.bf16 %v288, %v286
    %v330 = vpack.c.bf16 %v293, %v291
    %v331 = vpack.c.bf16 %v298, %v296
    %v332 = vpack.c.bf16 %v303, %v301
    %v333 = vpack.c.bf16 %v308, %v306
    %v334 = vpack.c.bf16 %v313, %v311
    %v335 = vpack.c.bf16 %v318, %v316
    %v336 = vld [vmem:[%s3] sm:$0x1]
    %v338 = vperm.slane %v336, 0
    %v372 = vunpack.c.l.b16 %v119
    %v373 = vunpack.c.h.b16 %v119
    %v374 = vunpack.c.l.b16 %v120
    %v375 = vunpack.c.h.b16 %v120
    %v376 = vunpack.c.l.b16 %v121
    %v377 = vunpack.c.h.b16 %v121
    %v378 = vunpack.c.l.b16 %v122
    %v379 = vunpack.c.h.b16 %v122
    %v380 = vunpack.c.l.b16 %v123
    %v381 = vunpack.c.h.b16 %v123
    %v382 = vunpack.c.l.b16 %v124
    %v383 = vunpack.c.h.b16 %v124
    %v384 = vunpack.c.l.b16 %v125
    %v385 = vunpack.c.h.b16 %v125
    %v386 = vunpack.c.l.b16 %v126
    %v387 = vunpack.c.h.b16 %v126
    %v388 = vunpack.c.l.b16 %v127
    %v389 = vunpack.c.h.b16 %v127
    %v390 = vunpack.c.l.b16 %v128
    %v391 = vunpack.c.h.b16 %v128
    %v392 = vunpack.c.l.b16 %v129
    %v393 = vunpack.c.h.b16 %v129
    %v394 = vunpack.c.l.b16 %v130
    %v395 = vunpack.c.h.b16 %v130
    %v396 = vunpack.c.l.b16 %v131
    %v397 = vunpack.c.h.b16 %v131
    %v398 = vunpack.c.l.b16 %v132
    %v399 = vunpack.c.h.b16 %v132
    %v400 = vunpack.c.l.b16 %v133
    %v401 = vunpack.c.h.b16 %v133
    %v402 = vunpack.c.l.b16 %v134
    %v403 = vunpack.c.h.b16 %v134
    %v404 = vunpack.c.l.b16 %v135
    %v405 = vunpack.c.h.b16 %v135
    %v406 = vunpack.c.l.b16 %v136
    %v407 = vunpack.c.h.b16 %v136
    %v408 = vunpack.c.l.b16 %v137
    %v409 = vunpack.c.h.b16 %v137
    %v410 = vunpack.c.l.b16 %v138
    %v411 = vunpack.c.h.b16 %v138
    %v412 = vunpack.c.l.b16 %v139
    %v413 = vunpack.c.h.b16 %v139
    %v414 = vunpack.c.l.b16 %v140
    %v415 = vunpack.c.h.b16 %v140
    %v416 = vunpack.c.l.b16 %v141
    %v417 = vunpack.c.h.b16 %v141
    %v418 = vunpack.c.l.b16 %v142
    %v419 = vunpack.c.h.b16 %v142
    %v420 = vunpack.c.l.b16 %v143
    %v421 = vunpack.c.h.b16 %v143
    %v422 = vunpack.c.l.b16 %v144
    %v423 = vunpack.c.h.b16 %v144
    %v424 = vunpack.c.l.b16 %v145
    %v425 = vunpack.c.h.b16 %v145
    %v426 = vunpack.c.l.b16 %v146
    %v427 = vunpack.c.h.b16 %v146
    %v428 = vunpack.c.l.b16 %v147
    %v429 = vunpack.c.h.b16 %v147
    %v430 = vunpack.c.l.b16 %v148
    %v431 = vunpack.c.h.b16 %v148
    %v432 = vunpack.c.l.b16 %v149
    %v433 = vunpack.c.h.b16 %v149
    %v434 = vunpack.c.l.b16 %v150
    %v435 = vunpack.c.h.b16 %v150
    %v436 = vpack.c.b16 %v374, %v372
    %v437 = vpack.c.b16 %v375, %v373
    %v438 = vpack.c.b16 %v378, %v376
    %v439 = vpack.c.b16 %v379, %v377
    %v440 = vpack.c.b16 %v382, %v380
    %v441 = vpack.c.b16 %v383, %v381
    %v442 = vpack.c.b16 %v386, %v384
    %v443 = vpack.c.b16 %v387, %v385
    %v444 = vpack.c.b16 %v390, %v388
    %v445 = vpack.c.b16 %v391, %v389
    %v446 = vpack.c.b16 %v394, %v392
    %v447 = vpack.c.b16 %v395, %v393
    %v448 = vpack.c.b16 %v398, %v396
    %v449 = vpack.c.b16 %v399, %v397
    %v450 = vpack.c.b16 %v402, %v400
    %v451 = vpack.c.b16 %v403, %v401
    %v452 = vpack.c.b16 %v406, %v404
    %v453 = vpack.c.b16 %v407, %v405
    %v454 = vpack.c.b16 %v410, %v408
    %v455 = vpack.c.b16 %v411, %v409
    %v456 = vpack.c.b16 %v414, %v412
    %v457 = vpack.c.b16 %v415, %v413
    %v458 = vpack.c.b16 %v418, %v416
    %v459 = vpack.c.b16 %v419, %v417
    %v460 = vpack.c.b16 %v422, %v420
    %v461 = vpack.c.b16 %v423, %v421
    %v462 = vpack.c.b16 %v426, %v424
    %v463 = vpack.c.b16 %v427, %v425
    %v464 = vpack.c.b16 %v430, %v428
    %v465 = vpack.c.b16 %v431, %v429
    %v466 = vpack.c.b16 %v434, %v432
    %v467 = vpack.c.b16 %v435, %v433
    %500 = vmatpush.bf16.msra.mxu0 %v327
    %501 = vmatpush.bf16.msra.mxu0 %v326
    %502 = vmatpush.bf16.msra.mxu0 %v325
    %503 = vmatpush.bf16.msra.mxu0 %v324
    %504 = vmatpush.bf16.msra.mxu0 %v323
    %505 = vmatpush.bf16.msra.mxu0 %v322
    %506 = vmatpush.bf16.msra.mxu0 %v321
    %507 = vmatpush.bf16.msra.mxu0 %v320
    %508 = vmatmul.bf16.gmra.mxu0 %v436
    %v509 = vpop.f32.mrf.mxu0
    %v510 = vadd.f32 %v338, %v509
    %v511 = vpop.f32.mrf.mxu0
    %v512 = vadd.f32 %v338, %v511
    %513 = vmatmul.bf16.gmra.mxu0 %v438
    %v514 = vpop.f32.mrf.mxu0
    %v515 = vadd.f32 %v338, %v514
    %v516 = vpop.f32.mrf.mxu0
    %v517 = vadd.f32 %v338, %v516
    %518 = vmatmul.bf16.gmra.mxu0 %v440
    %v519 = vpop.f32.mrf.mxu0
    %v520 = vadd.f32 %v338, %v519
    %v521 = vpop.f32.mrf.mxu0
    %v522 = vadd.f32 %v338, %v521
    %523 = vmatmul.bf16.gmra.mxu0 %v442
    %v524 = vpop.f32.mrf.mxu0
    %v525 = vadd.f32 %v338, %v524
    %v526 = vpop.f32.mrf.mxu0
    %v527 = vadd.f32 %v338, %v526
    %528 = vmatmul.bf16.gmra.mxu0 %v444
    %v529 = vpop.f32.mrf.mxu0
    %v530 = vadd.f32 %v338, %v529
    %v531 = vpop.f32.mrf.mxu0
    %v532 = vadd.f32 %v338, %v531
    %533 = vmatmul.bf16.gmra.mxu0 %v446
    %v534 = vpop.f32.mrf.mxu0
    %v535 = vadd.f32 %v338, %v534
    %v536 = vpop.f32.mrf.mxu0
    %v537 = vadd.f32 %v338, %v536
    %538 = vmatmul.bf16.gmra.mxu0 %v448
    %v539 = vpop.f32.mrf.mxu0
    %v540 = vadd.f32 %v338, %v539
    %v541 = vpop.f32.mrf.mxu0
    %v542 = vadd.f32 %v338, %v541
    %543 = vmatmul.bf16.gmra.mxu0 %v450
    %v544 = vpop.f32.mrf.mxu0
    %v545 = vadd.f32 %v338, %v544
    %v546 = vpop.f32.mrf.mxu0
    %v547 = vadd.f32 %v338, %v546
    %548 = vmatmul.bf16.gmra.mxu0 %v452
    %v549 = vpop.f32.mrf.mxu0
    %v550 = vadd.f32 %v338, %v549
    %v551 = vpop.f32.mrf.mxu0
    %v552 = vadd.f32 %v338, %v551
    %553 = vmatmul.bf16.gmra.mxu0 %v454
    %v554 = vpop.f32.mrf.mxu0
    %v555 = vadd.f32 %v338, %v554
    %v556 = vpop.f32.mrf.mxu0
    %v557 = vadd.f32 %v338, %v556
    %558 = vmatmul.bf16.gmra.mxu0 %v456
    %v559 = vpop.f32.mrf.mxu0
    %v560 = vadd.f32 %v338, %v559
    %v561 = vpop.f32.mrf.mxu0
    %v562 = vadd.f32 %v338, %v561
    %563 = vmatmul.bf16.gmra.mxu0 %v458
    %v564 = vpop.f32.mrf.mxu0
    %v565 = vadd.f32 %v338, %v564
    %v566 = vpop.f32.mrf.mxu0
    %v567 = vadd.f32 %v338, %v566
    %568 = vmatmul.bf16.gmra.mxu0 %v460
    %v569 = vpop.f32.mrf.mxu0
    %v570 = vadd.f32 %v338, %v569
    %v571 = vpop.f32.mrf.mxu0
    %v572 = vadd.f32 %v338, %v571
    %573 = vmatmul.bf16.gmra.mxu0 %v462
    %v574 = vpop.f32.mrf.mxu0
    %v575 = vadd.f32 %v338, %v574
    %v576 = vpop.f32.mrf.mxu0
    %v577 = vadd.f32 %v338, %v576
    %578 = vmatmul.bf16.gmra.mxu0 %v464
    %v579 = vpop.f32.mrf.mxu0
    %v580 = vadd.f32 %v338, %v579
    %v581 = vpop.f32.mrf.mxu0
    %v582 = vadd.f32 %v338, %v581
    %583 = vmatmul.bf16.gmra.mxu0 %v466
    %v584 = vpop.f32.mrf.mxu0
    %v585 = vadd.f32 %v338, %v584
    %v586 = vpop.f32.mrf.mxu0
    %v587 = vadd.f32 %v338, %v586
    %588 = vdwg.mxu0
    %589 = vmatpush.bf16.msra.mxu0 %v335
    %590 = vmatpush.bf16.msra.mxu0 %v334
    %591 = vmatpush.bf16.msra.mxu0 %v333
    %592 = vmatpush.bf16.msra.mxu0 %v332
    %593 = vmatpush.bf16.msra.mxu0 %v331
    %594 = vmatpush.bf16.msra.mxu0 %v330
    %595 = vmatpush.bf16.msra.mxu0 %v329
    %596 = vmatpush.bf16.msra.mxu0 %v328
    %597 = vmatmul.bf16.gmra.mxu0 %v437
    %v598 = vpop.f32.mrf.mxu0
    %v599 = vadd.f32 %v510, %v598
    %v600 = vpop.f32.mrf.mxu0
    %v601 = vadd.f32 %v512, %v600
    %602 = vmatmul.bf16.gmra.mxu0 %v439
    %v603 = vpop.f32.mrf.mxu0
    %v604 = vadd.f32 %v515, %v603
    %v605 = vpop.f32.mrf.mxu0
    %v606 = vadd.f32 %v517, %v605
    %607 = vmatmul.bf16.gmra.mxu0 %v441
    %v608 = vpop.f32.mrf.mxu0
    %v609 = vadd.f32 %v520, %v608
    %v610 = vpop.f32.mrf.mxu0
    %v611 = vadd.f32 %v522, %v610
    %612 = vmatmul.bf16.gmra.mxu0 %v443
    %v613 = vpop.f32.mrf.mxu0
    %v614 = vadd.f32 %v525, %v613
    %v615 = vpop.f32.mrf.mxu0
    %v616 = vadd.f32 %v527, %v615
    %617 = vmatmul.bf16.gmra.mxu0 %v445
    %v618 = vpop.f32.mrf.mxu0
    %v619 = vadd.f32 %v530, %v618
    %v620 = vpop.f32.mrf.mxu0
    %v621 = vadd.f32 %v532, %v620
    %622 = vmatmul.bf16.gmra.mxu0 %v447
    %v623 = vpop.f32.mrf.mxu0
    %v624 = vadd.f32 %v535, %v623
    %v625 = vpop.f32.mrf.mxu0
    %v626 = vadd.f32 %v537, %v625
    %627 = vmatmul.bf16.gmra.mxu0 %v449
    %v628 = vpop.f32.mrf.mxu0
    %v629 = vadd.f32 %v540, %v628
    %v630 = vpop.f32.mrf.mxu0
    %v631 = vadd.f32 %v542, %v630
    %632 = vmatmul.bf16.gmra.mxu0 %v451
    %v633 = vpop.f32.mrf.mxu0
    %v634 = vadd.f32 %v545, %v633
    %v635 = vpop.f32.mrf.mxu0
    %v636 = vadd.f32 %v547, %v635
    %637 = vmatmul.bf16.gmra.mxu0 %v453
    %v638 = vpop.f32.mrf.mxu0
    %v639 = vadd.f32 %v550, %v638
    %v640 = vpop.f32.mrf.mxu0
    %v641 = vadd.f32 %v552, %v640
    %642 = vmatmul.bf16.gmra.mxu0 %v455
    %v643 = vpop.f32.mrf.mxu0
    %v644 = vadd.f32 %v555, %v643
    %v645 = vpop.f32.mrf.mxu0
    %v646 = vadd.f32 %v557, %v645
    %647 = vmatmul.bf16.gmra.mxu0 %v457
    %v648 = vpop.f32.mrf.mxu0
    %v649 = vadd.f32 %v560, %v648
    %v650 = vpop.f32.mrf.mxu0
    %v651 = vadd.f32 %v562, %v650
    %652 = vmatmul.bf16.gmra.mxu0 %v459
    %v653 = vpop.f32.mrf.mxu0
    %v654 = vadd.f32 %v565, %v653
    %v655 = vpop.f32.mrf.mxu0
    %v656 = vadd.f32 %v567, %v655
    %657 = vmatmul.bf16.gmra.mxu0 %v461
    %v658 = vpop.f32.mrf.mxu0
    %v659 = vadd.f32 %v570, %v658
    %v660 = vpop.f32.mrf.mxu0
    %v661 = vadd.f32 %v572, %v660
    %662 = vmatmul.bf16.gmra.mxu0 %v463
    %v663 = vpop.f32.mrf.mxu0
    %v664 = vadd.f32 %v575, %v663
    %v665 = vpop.f32.mrf.mxu0
    %v666 = vadd.f32 %v577, %v665
    %667 = vmatmul.bf16.gmra.mxu0 %v465
    %v668 = vpop.f32.mrf.mxu0
    %v669 = vadd.f32 %v580, %v668
    %v670 = vpop.f32.mrf.mxu0
    %v671 = vadd.f32 %v582, %v670
    %672 = vmatmul.bf16.gmra.mxu0 %v467
    %v673 = vpop.f32.mrf.mxu0
    %v674 = vadd.f32 %v585, %v673
    %v675 = vpop.f32.mrf.mxu0
    %v676 = vadd.f32 %v587, %v675
    %677 = vdwg.mxu0
    %v678 = vmul.f32 %v599, %v599
    %v679 = vmul.f32 %v601, %v601
    %v680 = vmul.f32 %v604, %v604
    %v681 = vmul.f32 %v606, %v606
    %v682 = vmul.f32 %v609, %v609
    %v683 = vmul.f32 %v611, %v611
    %v684 = vmul.f32 %v614, %v614
    %v685 = vmul.f32 %v616, %v616
    %v686 = vmul.f32 %v619, %v619
    %v687 = vmul.f32 %v621, %v621
    %v688 = vmul.f32 %v624, %v624
    %v689 = vmul.f32 %v626, %v626
    %v690 = vmul.f32 %v629, %v629
    %v691 = vmul.f32 %v631, %v631
    %v692 = vmul.f32 %v634, %v634
    %v693 = vmul.f32 %v636, %v636
    %v694 = vmul.f32 %v639, %v639
    %v695 = vmul.f32 %v641, %v641
    %v696 = vmul.f32 %v644, %v644
    %v697 = vmul.f32 %v646, %v646
    %v698 = vmul.f32 %v649, %v649
    %v699 = vmul.f32 %v651, %v651
    %v700 = vmul.f32 %v654, %v654
    %v701 = vmul.f32 %v656, %v656
    %v702 = vmul.f32 %v659, %v659
    %v703 = vmul.f32 %v661, %v661
    %v704 = vmul.f32 %v664, %v664
    %v705 = vmul.f32 %v666, %v666
    %v706 = vmul.f32 %v669, %v669
    %v707 = vmul.f32 %v671, %v671
    %v708 = vmul.f32 %v674, %v674
    %v709 = vmul.f32 %v676, %v676
    %710 = vadd.xlane.f32.xlu0 %v678
    %v711 = vpop.xlane.xlu0 %710
    %712 = vadd.xlane.f32.xlu0 %v679
    %v713 = vpop.xlane.xlu0 %712
    %714 = vadd.xlane.f32.xlu0 %v680
    %v715 = vpop.xlane.xlu0 %714
    %716 = vadd.xlane.f32.xlu0 %v681
    %v717 = vpop.xlane.xlu0 %716
    %718 = vadd.xlane.f32.xlu0 %v682
    %v719 = vpop.xlane.xlu0 %718
    %720 = vadd.xlane.f32.xlu0 %v683
    %v721 = vpop.xlane.xlu0 %720
    %722 = vadd.xlane.f32.xlu0 %v684
    %v723 = vpop.xlane.xlu0 %722
    %724 = vadd.xlane.f32.xlu0 %v685
    %v725 = vpop.xlane.xlu0 %724
    %726 = vadd.xlane.f32.xlu0 %v686
    %v727 = vpop.xlane.xlu0 %726
    %728 = vadd.xlane.f32.xlu0 %v687
    %v729 = vpop.xlane.xlu0 %728
    %730 = vadd.xlane.f32.xlu0 %v688
    %v731 = vpop.xlane.xlu0 %730
    %732 = vadd.xlane.f32.xlu0 %v689
    %v733 = vpop.xlane.xlu0 %732
    %734 = vadd.xlane.f32.xlu0 %v690
    %v735 = vpop.xlane.xlu0 %734
    %736 = vadd.xlane.f32.xlu0 %v691
    %v737 = vpop.xlane.xlu0 %736
    %738 = vadd.xlane.f32.xlu0 %v692
    %v739 = vpop.xlane.xlu0 %738
    %740 = vadd.xlane.f32.xlu0 %v693
    %v741 = vpop.xlane.xlu0 %740
    %742 = vadd.xlane.f32.xlu0 %v694
    %v743 = vpop.xlane.xlu0 %742
    %744 = vadd.xlane.f32.xlu0 %v695
    %v745 = vpop.xlane.xlu0 %744
    %746 = vadd.xlane.f32.xlu0 %v696
    %v747 = vpop.xlane.xlu0 %746
    %748 = vadd.xlane.f32.xlu0 %v697
    %v749 = vpop.xlane.xlu0 %748
    %750 = vadd.xlane.f32.xlu0 %v698
    %v751 = vpop.xlane.xlu0 %750
    %752 = vadd.xlane.f32.xlu0 %v699
    %v753 = vpop.xlane.xlu0 %752
    %754 = vadd.xlane.f32.xlu0 %v700
    %v755 = vpop.xlane.xlu0 %754
    %756 = vadd.xlane.f32.xlu0 %v701
    %v757 = vpop.xlane.xlu0 %756
    %758 = vadd.xlane.f32.xlu0 %v702
    %v759 = vpop.xlane.xlu0 %758
    %760 = vadd.xlane.f32.xlu0 %v703
    %v761 = vpop.xlane.xlu0 %760
    %762 = vadd.xlane.f32.xlu0 %v704
    %v763 = vpop.xlane.xlu0 %762
    %764 = vadd.xlane.f32.xlu0 %v705
    %v765 = vpop.xlane.xlu0 %764
    %766 = vadd.xlane.f32.xlu0 %v706
    %v767 = vpop.xlane.xlu0 %766
    %768 = vadd.xlane.f32.xlu0 %v707
    %v769 = vpop.xlane.xlu0 %768
    %770 = vadd.xlane.f32.xlu0 %v708
    %v771 = vpop.xlane.xlu0 %770
    %772 = vadd.xlane.f32.xlu0 %v709
    %v773 = vpop.xlane.xlu0 %772
    %v774 = vmax.f32 %v711, 1e-24
    %v775 = vmax.f32 %v713, 1e-24
    %v776 = vmax.f32 %v715, 1e-24
    %v777 = vmax.f32 %v717, 1e-24
    %v778 = vmax.f32 %v719, 1e-24
    %v779 = vmax.f32 %v721, 1e-24
    %v780 = vmax.f32 %v723, 1e-24
    %v781 = vmax.f32 %v725, 1e-24
    %v782 = vmax.f32 %v727, 1e-24
    %v783 = vmax.f32 %v729, 1e-24
    %v784 = vmax.f32 %v731, 1e-24
    %v785 = vmax.f32 %v733, 1e-24
    %v786 = vmax.f32 %v735, 1e-24
    %v787 = vmax.f32 %v737, 1e-24
    %v788 = vmax.f32 %v739, 1e-24
    %v789 = vmax.f32 %v741, 1e-24
    %v790 = vmax.f32 %v743, 1e-24
    %v791 = vmax.f32 %v745, 1e-24
    %v792 = vmax.f32 %v747, 1e-24
    %v793 = vmax.f32 %v749, 1e-24
    %v794 = vmax.f32 %v751, 1e-24
    %v795 = vmax.f32 %v753, 1e-24
    %v796 = vmax.f32 %v755, 1e-24
    %v797 = vmax.f32 %v757, 1e-24
    %v798 = vmax.f32 %v759, 1e-24
    %v799 = vmax.f32 %v761, 1e-24
    %v800 = vmax.f32 %v763, 1e-24
    %v801 = vmax.f32 %v765, 1e-24
    %v802 = vmax.f32 %v767, 1e-24
    %v803 = vmax.f32 %v769, 1e-24
    %v804 = vmax.f32 %v771, 1e-24
    %v805 = vmax.f32 %v773, 1e-24
    %v806 = vrsqrt.pop %v774
    %v807 = vmul.f32 %v806, %v774
    %v808 = vmul.f32 %v807, %v806
    %v809 = vmul.f32 0.5, %v808
    %v810 = vsub.f32 1.5, %v809
    %v811 = vmul.f32 %v806, %v810
    %vm812 = vweird.f32 %v774
    %vm813 = vweird.f32 %v806
    %vm814 = vmor %vm812, %vm813
    %v815 = vsel %vm814, %v806, %v811
    %v816 = vrsqrt.pop %v775
    %v817 = vmul.f32 %v816, %v775
    %v818 = vmul.f32 %v817, %v816
    %v819 = vmul.f32 0.5, %v818
    %v820 = vsub.f32 1.5, %v819
    %v821 = vmul.f32 %v816, %v820
    %vm822 = vweird.f32 %v775
    %vm823 = vweird.f32 %v816
    %vm824 = vmor %vm822, %vm823
    %v825 = vsel %vm824, %v816, %v821
    %v826 = vrsqrt.pop %v776
    %v827 = vmul.f32 %v826, %v776
    %v828 = vmul.f32 %v827, %v826
    %v829 = vmul.f32 0.5, %v828
    %v830 = vsub.f32 1.5, %v829
    %v831 = vmul.f32 %v826, %v830
    %vm832 = vweird.f32 %v776
    %vm833 = vweird.f32 %v826
    %vm834 = vmor %vm832, %vm833
    %v835 = vsel %vm834, %v826, %v831
    %v836 = vrsqrt.pop %v777
    %v837 = vmul.f32 %v836, %v777
    %v838 = vmul.f32 %v837, %v836
    %v839 = vmul.f32 0.5, %v838
    %v840 = vsub.f32 1.5, %v839
    %v841 = vmul.f32 %v836, %v840
    %vm842 = vweird.f32 %v777
    %vm843 = vweird.f32 %v836
    %vm844 = vmor %vm842, %vm843
    %v845 = vsel %vm844, %v836, %v841
    %v846 = vrsqrt.pop %v778
    %v847 = vmul.f32 %v846, %v778
    %v848 = vmul.f32 %v847, %v846
    %v849 = vmul.f32 0.5, %v848
    %v850 = vsub.f32 1.5, %v849
    %v851 = vmul.f32 %v846, %v850
    %vm852 = vweird.f32 %v778
    %vm853 = vweird.f32 %v846
    %vm854 = vmor %vm852, %vm853
    %v855 = vsel %vm854, %v846, %v851
    %v856 = vrsqrt.pop %v779
    %v857 = vmul.f32 %v856, %v779
    %v858 = vmul.f32 %v857, %v856
    %v859 = vmul.f32 0.5, %v858
    %v860 = vsub.f32 1.5, %v859
    %v861 = vmul.f32 %v856, %v860
    %vm862 = vweird.f32 %v779
    %vm863 = vweird.f32 %v856
    %vm864 = vmor %vm862, %vm863
    %v865 = vsel %vm864, %v856, %v861
    %v866 = vrsqrt.pop %v780
    %v867 = vmul.f32 %v866, %v780
    %v868 = vmul.f32 %v867, %v866
    %v869 = vmul.f32 0.5, %v868
    %v870 = vsub.f32 1.5, %v869
    %v871 = vmul.f32 %v866, %v870
    %vm872 = vweird.f32 %v780
    %vm873 = vweird.f32 %v866
    %vm874 = vmor %vm872, %vm873
    %v875 = vsel %vm874, %v866, %v871
    %v876 = vrsqrt.pop %v781
    %v877 = vmul.f32 %v876, %v781
    %v878 = vmul.f32 %v877, %v876
    %v879 = vmul.f32 0.5, %v878
    %v880 = vsub.f32 1.5, %v879
    %v881 = vmul.f32 %v876, %v880
    %vm882 = vweird.f32 %v781
    %vm883 = vweird.f32 %v876
    %vm884 = vmor %vm882, %vm883
    %v885 = vsel %vm884, %v876, %v881
    %v886 = vrsqrt.pop %v782
    %v887 = vmul.f32 %v886, %v782
    %v888 = vmul.f32 %v887, %v886
    %v889 = vmul.f32 0.5, %v888
    %v890 = vsub.f32 1.5, %v889
    %v891 = vmul.f32 %v886, %v890
    %vm892 = vweird.f32 %v782
    %vm893 = vweird.f32 %v886
    %vm894 = vmor %vm892, %vm893
    %v895 = vsel %vm894, %v886, %v891
    %v896 = vrsqrt.pop %v783
    %v897 = vmul.f32 %v896, %v783
    %v898 = vmul.f32 %v897, %v896
    %v899 = vmul.f32 0.5, %v898
    %v900 = vsub.f32 1.5, %v899
    %v901 = vmul.f32 %v896, %v900
    %vm902 = vweird.f32 %v783
    %vm903 = vweird.f32 %v896
    %vm904 = vmor %vm902, %vm903
    %v905 = vsel %vm904, %v896, %v901
    %v906 = vrsqrt.pop %v784
    %v907 = vmul.f32 %v906, %v784
    %v908 = vmul.f32 %v907, %v906
    %v909 = vmul.f32 0.5, %v908
    %v910 = vsub.f32 1.5, %v909
    %v911 = vmul.f32 %v906, %v910
    %vm912 = vweird.f32 %v784
    %vm913 = vweird.f32 %v906
    %vm914 = vmor %vm912, %vm913
    %v915 = vsel %vm914, %v906, %v911
    %v916 = vrsqrt.pop %v785
    %v917 = vmul.f32 %v916, %v785
    %v918 = vmul.f32 %v917, %v916
    %v919 = vmul.f32 0.5, %v918
    %v920 = vsub.f32 1.5, %v919
    %v921 = vmul.f32 %v916, %v920
    %vm922 = vweird.f32 %v785
    %vm923 = vweird.f32 %v916
    %vm924 = vmor %vm922, %vm923
    %v925 = vsel %vm924, %v916, %v921
    %v926 = vrsqrt.pop %v786
    %v927 = vmul.f32 %v926, %v786
    %v928 = vmul.f32 %v927, %v926
    %v929 = vmul.f32 0.5, %v928
    %v930 = vsub.f32 1.5, %v929
    %v931 = vmul.f32 %v926, %v930
    %vm932 = vweird.f32 %v786
    %vm933 = vweird.f32 %v926
    %vm934 = vmor %vm932, %vm933
    %v935 = vsel %vm934, %v926, %v931
    %v936 = vrsqrt.pop %v787
    %v937 = vmul.f32 %v936, %v787
    %v938 = vmul.f32 %v937, %v936
    %v939 = vmul.f32 0.5, %v938
    %v940 = vsub.f32 1.5, %v939
    %v941 = vmul.f32 %v936, %v940
    %vm942 = vweird.f32 %v787
    %vm943 = vweird.f32 %v936
    %vm944 = vmor %vm942, %vm943
    %v945 = vsel %vm944, %v936, %v941
    %v946 = vrsqrt.pop %v788
    %v947 = vmul.f32 %v946, %v788
    %v948 = vmul.f32 %v947, %v946
    %v949 = vmul.f32 0.5, %v948
    %v950 = vsub.f32 1.5, %v949
    %v951 = vmul.f32 %v946, %v950
    %vm952 = vweird.f32 %v788
    %vm953 = vweird.f32 %v946
    %vm954 = vmor %vm952, %vm953
    %v955 = vsel %vm954, %v946, %v951
    %v956 = vrsqrt.pop %v789
    %v957 = vmul.f32 %v956, %v789
    %v958 = vmul.f32 %v957, %v956
    %v959 = vmul.f32 0.5, %v958
    %v960 = vsub.f32 1.5, %v959
    %v961 = vmul.f32 %v956, %v960
    %vm962 = vweird.f32 %v789
    %vm963 = vweird.f32 %v956
    %vm964 = vmor %vm962, %vm963
    %v965 = vsel %vm964, %v956, %v961
    %v966 = vrsqrt.pop %v790
    %v967 = vmul.f32 %v966, %v790
    %v968 = vmul.f32 %v967, %v966
    %v969 = vmul.f32 0.5, %v968
    %v970 = vsub.f32 1.5, %v969
    %v971 = vmul.f32 %v966, %v970
    %vm972 = vweird.f32 %v790
    %vm973 = vweird.f32 %v966
    %vm974 = vmor %vm972, %vm973
    %v975 = vsel %vm974, %v966, %v971
    %v976 = vrsqrt.pop %v791
    %v977 = vmul.f32 %v976, %v791
    %v978 = vmul.f32 %v977, %v976
    %v979 = vmul.f32 0.5, %v978
    %v980 = vsub.f32 1.5, %v979
    %v981 = vmul.f32 %v976, %v980
    %vm982 = vweird.f32 %v791
    %vm983 = vweird.f32 %v976
    %vm984 = vmor %vm982, %vm983
    %v985 = vsel %vm984, %v976, %v981
    %v986 = vrsqrt.pop %v792
    %v987 = vmul.f32 %v986, %v792
    %v988 = vmul.f32 %v987, %v986
    %v989 = vmul.f32 0.5, %v988
    %v990 = vsub.f32 1.5, %v989
    %v991 = vmul.f32 %v986, %v990
    %vm992 = vweird.f32 %v792
    %vm993 = vweird.f32 %v986
    %vm994 = vmor %vm992, %vm993
    %v995 = vsel %vm994, %v986, %v991
    %v996 = vrsqrt.pop %v793
    %v997 = vmul.f32 %v996, %v793
    %v998 = vmul.f32 %v997, %v996
    %v999 = vmul.f32 0.5, %v998
    %v1000 = vsub.f32 1.5, %v999
    %v1001 = vmul.f32 %v996, %v1000
    %vm1002 = vweird.f32 %v793
    %vm1003 = vweird.f32 %v996
    %vm1004 = vmor %vm1002, %vm1003
    %v1005 = vsel %vm1004, %v996, %v1001
    %v1006 = vrsqrt.pop %v794
    %v1007 = vmul.f32 %v1006, %v794
    %v1008 = vmul.f32 %v1007, %v1006
    %v1009 = vmul.f32 0.5, %v1008
    %v1010 = vsub.f32 1.5, %v1009
    %v1011 = vmul.f32 %v1006, %v1010
    %vm1012 = vweird.f32 %v794
    %vm1013 = vweird.f32 %v1006
    %vm1014 = vmor %vm1012, %vm1013
    %v1015 = vsel %vm1014, %v1006, %v1011
    %v1016 = vrsqrt.pop %v795
    %v1017 = vmul.f32 %v1016, %v795
    %v1018 = vmul.f32 %v1017, %v1016
    %v1019 = vmul.f32 0.5, %v1018
    %v1020 = vsub.f32 1.5, %v1019
    %v1021 = vmul.f32 %v1016, %v1020
    %vm1022 = vweird.f32 %v795
    %vm1023 = vweird.f32 %v1016
    %vm1024 = vmor %vm1022, %vm1023
    %v1025 = vsel %vm1024, %v1016, %v1021
    %v1026 = vrsqrt.pop %v796
    %v1027 = vmul.f32 %v1026, %v796
    %v1028 = vmul.f32 %v1027, %v1026
    %v1029 = vmul.f32 0.5, %v1028
    %v1030 = vsub.f32 1.5, %v1029
    %v1031 = vmul.f32 %v1026, %v1030
    %vm1032 = vweird.f32 %v796
    %vm1033 = vweird.f32 %v1026
    %vm1034 = vmor %vm1032, %vm1033
    %v1035 = vsel %vm1034, %v1026, %v1031
    %v1036 = vrsqrt.pop %v797
    %v1037 = vmul.f32 %v1036, %v797
    %v1038 = vmul.f32 %v1037, %v1036
    %v1039 = vmul.f32 0.5, %v1038
    %v1040 = vsub.f32 1.5, %v1039
    %v1041 = vmul.f32 %v1036, %v1040
    %vm1042 = vweird.f32 %v797
    %vm1043 = vweird.f32 %v1036
    %vm1044 = vmor %vm1042, %vm1043
    %v1045 = vsel %vm1044, %v1036, %v1041
    %v1046 = vrsqrt.pop %v798
    %v1047 = vmul.f32 %v1046, %v798
    %v1048 = vmul.f32 %v1047, %v1046
    %v1049 = vmul.f32 0.5, %v1048
    %v1050 = vsub.f32 1.5, %v1049
    %v1051 = vmul.f32 %v1046, %v1050
    %vm1052 = vweird.f32 %v798
    %vm1053 = vweird.f32 %v1046
    %vm1054 = vmor %vm1052, %vm1053
    %v1055 = vsel %vm1054, %v1046, %v1051
    %v1056 = vrsqrt.pop %v799
    %v1057 = vmul.f32 %v1056, %v799
    %v1058 = vmul.f32 %v1057, %v1056
    %v1059 = vmul.f32 0.5, %v1058
    %v1060 = vsub.f32 1.5, %v1059
    %v1061 = vmul.f32 %v1056, %v1060
    %vm1062 = vweird.f32 %v799
    %vm1063 = vweird.f32 %v1056
    %vm1064 = vmor %vm1062, %vm1063
    %v1065 = vsel %vm1064, %v1056, %v1061
    %v1066 = vrsqrt.pop %v800
    %v1067 = vmul.f32 %v1066, %v800
    %v1068 = vmul.f32 %v1067, %v1066
    %v1069 = vmul.f32 0.5, %v1068
    %v1070 = vsub.f32 1.5, %v1069
    %v1071 = vmul.f32 %v1066, %v1070
    %vm1072 = vweird.f32 %v800
    %vm1073 = vweird.f32 %v1066
    %vm1074 = vmor %vm1072, %vm1073
    %v1075 = vsel %vm1074, %v1066, %v1071
    %v1076 = vrsqrt.pop %v801
    %v1077 = vmul.f32 %v1076, %v801
    %v1078 = vmul.f32 %v1077, %v1076
    %v1079 = vmul.f32 0.5, %v1078
    %v1080 = vsub.f32 1.5, %v1079
    %v1081 = vmul.f32 %v1076, %v1080
    %vm1082 = vweird.f32 %v801
    %vm1083 = vweird.f32 %v1076
    %vm1084 = vmor %vm1082, %vm1083
    %v1085 = vsel %vm1084, %v1076, %v1081
    %v1086 = vrsqrt.pop %v802
    %v1087 = vmul.f32 %v1086, %v802
    %v1088 = vmul.f32 %v1087, %v1086
    %v1089 = vmul.f32 0.5, %v1088
    %v1090 = vsub.f32 1.5, %v1089
    %v1091 = vmul.f32 %v1086, %v1090
    %vm1092 = vweird.f32 %v802
    %vm1093 = vweird.f32 %v1086
    %vm1094 = vmor %vm1092, %vm1093
    %v1095 = vsel %vm1094, %v1086, %v1091
    %v1096 = vrsqrt.pop %v803
    %v1097 = vmul.f32 %v1096, %v803
    %v1098 = vmul.f32 %v1097, %v1096
    %v1099 = vmul.f32 0.5, %v1098
    %v1100 = vsub.f32 1.5, %v1099
    %v1101 = vmul.f32 %v1096, %v1100
    %vm1102 = vweird.f32 %v803
    %vm1103 = vweird.f32 %v1096
    %vm1104 = vmor %vm1102, %vm1103
    %v1105 = vsel %vm1104, %v1096, %v1101
    %v1106 = vrsqrt.pop %v804
    %v1107 = vmul.f32 %v1106, %v804
    %v1108 = vmul.f32 %v1107, %v1106
    %v1109 = vmul.f32 0.5, %v1108
    %v1110 = vsub.f32 1.5, %v1109
    %v1111 = vmul.f32 %v1106, %v1110
    %vm1112 = vweird.f32 %v804
    %vm1113 = vweird.f32 %v1106
    %vm1114 = vmor %vm1112, %vm1113
    %v1115 = vsel %vm1114, %v1106, %v1111
    %v1116 = vrsqrt.pop %v805
    %v1117 = vmul.f32 %v1116, %v805
    %v1118 = vmul.f32 %v1117, %v1116
    %v1119 = vmul.f32 0.5, %v1118
    %v1120 = vsub.f32 1.5, %v1119
    %v1121 = vmul.f32 %v1116, %v1120
    %vm1122 = vweird.f32 %v805
    %vm1123 = vweird.f32 %v1116
    %vm1124 = vmor %vm1122, %vm1123
    %v1125 = vsel %vm1124, %v1116, %v1121
    %v1126 = vmul.f32 %v599, %v815
    %v1127 = vmul.f32 %v601, %v825
    %v1128 = vmul.f32 %v604, %v835
    %v1129 = vmul.f32 %v606, %v845
    %v1130 = vmul.f32 %v609, %v855
    %v1131 = vmul.f32 %v611, %v865
    %v1132 = vmul.f32 %v614, %v875
    %v1133 = vmul.f32 %v616, %v885
    %v1134 = vmul.f32 %v619, %v895
    %v1135 = vmul.f32 %v621, %v905
    %v1136 = vmul.f32 %v624, %v915
    %v1137 = vmul.f32 %v626, %v925
    %v1138 = vmul.f32 %v629, %v935
    %v1139 = vmul.f32 %v631, %v945
    %v1140 = vmul.f32 %v634, %v955
    %v1141 = vmul.f32 %v636, %v965
    %v1142 = vmul.f32 %v639, %v975
    %v1143 = vmul.f32 %v641, %v985
    %v1144 = vmul.f32 %v644, %v995
    %v1145 = vmul.f32 %v646, %v1005
    %v1146 = vmul.f32 %v649, %v1015
    %v1147 = vmul.f32 %v651, %v1025
    %v1148 = vmul.f32 %v654, %v1035
    %v1149 = vmul.f32 %v656, %v1045
    %v1150 = vmul.f32 %v659, %v1055
    %v1151 = vmul.f32 %v661, %v1065
    %v1152 = vmul.f32 %v664, %v1075
    %v1153 = vmul.f32 %v666, %v1085
    %v1154 = vmul.f32 %v669, %v1095
    %v1155 = vmul.f32 %v671, %v1105
    %v1156 = vmul.f32 %v674, %v1115
    %v1157 = vmul.f32 %v676, %v1125
    %v1158 = vpack.c.bf16 %v1127, %v1126
    %v1159 = vpack.c.bf16 %v1129, %v1128
    %v1160 = vpack.c.bf16 %v1131, %v1130
    %v1161 = vpack.c.bf16 %v1133, %v1132
    %v1162 = vpack.c.bf16 %v1135, %v1134
    %v1163 = vpack.c.bf16 %v1137, %v1136
    %v1164 = vpack.c.bf16 %v1139, %v1138
    %v1165 = vpack.c.bf16 %v1141, %v1140
    %v1166 = vpack.c.bf16 %v1143, %v1142
    %v1167 = vpack.c.bf16 %v1145, %v1144
    %v1168 = vpack.c.bf16 %v1147, %v1146
    %v1169 = vpack.c.bf16 %v1149, %v1148
    %v1170 = vpack.c.bf16 %v1151, %v1150
    %v1171 = vpack.c.bf16 %v1153, %v1152
    %v1172 = vpack.c.bf16 %v1155, %v1154
    %v1173 = vpack.c.bf16 %v1157, %v1156
    %v1174 = vld [vmem:[#allocation8] sm:$0xf]
    %v1175 = vld [vmem:[#allocation8 + $0x4] sm:$0xf]
    %v1176 = vld [vmem:[#allocation8 + $0x8] sm:$0xf]
    %v1177 = vld [vmem:[#allocation8 + $0xc] sm:$0xf]
    %v1178 = vld [vmem:[#allocation8 + $0x10] sm:$0xf]
    %v1179 = vld [vmem:[#allocation8 + $0x14] sm:$0xf]
    %v1180 = vld [vmem:[#allocation8 + $0x18] sm:$0xf]
    %v1181 = vld [vmem:[#allocation8 + $0x1c] sm:$0xf]
    %v1182 = vld [vmem:[#allocation8 + $0x20] sm:$0xf]
    %v1183 = vld [vmem:[#allocation8 + $0x24] sm:$0xf]
    %v1184 = vld [vmem:[#allocation8 + $0x28] sm:$0xf]
    %v1185 = vld [vmem:[#allocation8 + $0x2c] sm:$0xf]
    %v1186 = vld [vmem:[#allocation8 + $0x30] sm:$0xf]
    %v1187 = vld [vmem:[#allocation8 + $0x34] sm:$0xf]
    %v1188 = vld [vmem:[#allocation8 + $0x38] sm:$0xf]
    %v1189 = vld [vmem:[#allocation8 + $0x3c] sm:$0xf]
    %v1206 = vunpack.c.l.b16 %v1174
    %v1207 = vunpack.c.l.b16 %v1175
    %v1208 = vunpack.c.l.b16 %v1176
    %v1209 = vunpack.c.l.b16 %v1177
    %v1210 = vunpack.c.l.b16 %v1178
    %v1211 = vunpack.c.l.b16 %v1179
    %v1212 = vunpack.c.l.b16 %v1180
    %v1213 = vunpack.c.l.b16 %v1181
    %v1214 = vunpack.c.l.b16 %v1182
    %v1215 = vunpack.c.l.b16 %v1183
    %v1216 = vunpack.c.l.b16 %v1184
    %v1217 = vunpack.c.l.b16 %v1185
    %v1218 = vunpack.c.l.b16 %v1186
    %v1219 = vunpack.c.l.b16 %v1187
    %v1220 = vunpack.c.l.b16 %v1188
    %v1221 = vunpack.c.l.b16 %v1189
    %v1222 = vpack.c.b16 %v1207, %v1206
    %v1223 = vpack.c.b16 %v1209, %v1208
    %v1224 = vpack.c.b16 %v1211, %v1210
    %v1225 = vpack.c.b16 %v1213, %v1212
    %v1226 = vpack.c.b16 %v1215, %v1214
    %v1227 = vpack.c.b16 %v1217, %v1216
    %v1228 = vpack.c.b16 %v1219, %v1218
    %v1229 = vpack.c.b16 %v1221, %v1220
    %1238 = vmatpush.bf16.msra.mxu0 %v1229
    %1239 = vmatpush.bf16.msra.mxu0 %v1228
    %1240 = vmatpush.bf16.msra.mxu0 %v1227
    %1241 = vmatpush.bf16.msra.mxu0 %v1226
    %1242 = vmatpush.bf16.msra.mxu0 %v1225
    %1243 = vmatpush.bf16.msra.mxu0 %v1224
    %1244 = vmatpush.bf16.msra.mxu0 %v1223
    %1245 = vmatpush.bf16.msra.mxu0 %v1222
    %1246 = vmatmul.bf16.gmra.mxu0 %v1158
    %v1247 = vpop.f32.mrf.mxu0
    %v1248 = vadd.f32 0.0, %v1247
    %v1249 = vpop.f32.mrf.mxu0
    %v1250 = vadd.f32 0.0, %v1249
    %1251 = vmatmul.bf16.gmra.mxu0 %v1159
    %v1252 = vpop.f32.mrf.mxu0
    %v1253 = vadd.f32 0.0, %v1252
    %v1254 = vpop.f32.mrf.mxu0
    %v1255 = vadd.f32 0.0, %v1254
    %1256 = vmatmul.bf16.gmra.mxu0 %v1160
    %v1257 = vpop.f32.mrf.mxu0
    %v1258 = vadd.f32 0.0, %v1257
    %v1259 = vpop.f32.mrf.mxu0
    %v1260 = vadd.f32 0.0, %v1259
    %1261 = vmatmul.bf16.gmra.mxu0 %v1161
    %v1262 = vpop.f32.mrf.mxu0
    %v1263 = vadd.f32 0.0, %v1262
    %v1264 = vpop.f32.mrf.mxu0
    %v1265 = vadd.f32 0.0, %v1264
    %1266 = vmatmul.bf16.gmra.mxu0 %v1162
    %v1267 = vpop.f32.mrf.mxu0
    %v1268 = vadd.f32 0.0, %v1267
    %v1269 = vpop.f32.mrf.mxu0
    %v1270 = vadd.f32 0.0, %v1269
    %1271 = vmatmul.bf16.gmra.mxu0 %v1163
    %v1272 = vpop.f32.mrf.mxu0
    %v1273 = vadd.f32 0.0, %v1272
    %v1274 = vpop.f32.mrf.mxu0
    %v1275 = vadd.f32 0.0, %v1274
    %1276 = vmatmul.bf16.gmra.mxu0 %v1164
    %v1277 = vpop.f32.mrf.mxu0
    %v1278 = vadd.f32 0.0, %v1277
    %v1279 = vpop.f32.mrf.mxu0
    %v1280 = vadd.f32 0.0, %v1279
    %1281 = vmatmul.bf16.gmra.mxu0 %v1165
    %v1282 = vpop.f32.mrf.mxu0
    %v1283 = vadd.f32 0.0, %v1282
    %v1284 = vpop.f32.mrf.mxu0
    %v1285 = vadd.f32 0.0, %v1284
    %1286 = vmatmul.bf16.gmra.mxu0 %v1166
    %v1287 = vpop.f32.mrf.mxu0
    %v1288 = vadd.f32 0.0, %v1287
    %v1289 = vpop.f32.mrf.mxu0
    %v1290 = vadd.f32 0.0, %v1289
    %1291 = vmatmul.bf16.gmra.mxu0 %v1167
    %v1292 = vpop.f32.mrf.mxu0
    %v1293 = vadd.f32 0.0, %v1292
    %v1294 = vpop.f32.mrf.mxu0
    %v1295 = vadd.f32 0.0, %v1294
    %1296 = vmatmul.bf16.gmra.mxu0 %v1168
    %v1297 = vpop.f32.mrf.mxu0
    %v1298 = vadd.f32 0.0, %v1297
    %v1299 = vpop.f32.mrf.mxu0
    %v1300 = vadd.f32 0.0, %v1299
    %1301 = vmatmul.bf16.gmra.mxu0 %v1169
    %v1302 = vpop.f32.mrf.mxu0
    %v1303 = vadd.f32 0.0, %v1302
    %v1304 = vpop.f32.mrf.mxu0
    %v1305 = vadd.f32 0.0, %v1304
    %1306 = vmatmul.bf16.gmra.mxu0 %v1170
    %v1307 = vpop.f32.mrf.mxu0
    %v1308 = vadd.f32 0.0, %v1307
    %v1309 = vpop.f32.mrf.mxu0
    %v1310 = vadd.f32 0.0, %v1309
    %1311 = vmatmul.bf16.gmra.mxu0 %v1171
    %v1312 = vpop.f32.mrf.mxu0
    %v1313 = vadd.f32 0.0, %v1312
    %v1314 = vpop.f32.mrf.mxu0
    %v1315 = vadd.f32 0.0, %v1314
    %1316 = vmatmul.bf16.gmra.mxu0 %v1172
    %v1317 = vpop.f32.mrf.mxu0
    %v1318 = vadd.f32 0.0, %v1317
    %v1319 = vpop.f32.mrf.mxu0
    %v1320 = vadd.f32 0.0, %v1319
    %1321 = vmatmul.bf16.gmra.mxu0 %v1173
    %v1322 = vpop.f32.mrf.mxu0
    %v1323 = vadd.f32 0.0, %v1322
    %v1324 = vpop.f32.mrf.mxu0
    %v1325 = vadd.f32 0.0, %v1324
    %1326 = vdwg.mxu0
    %v1327 = vpack.c.bf16 %v1250, %v1248
    %v1328 = vpack.c.bf16 %v1255, %v1253
    %v1329 = vpack.c.bf16 %v1260, %v1258
    %v1330 = vpack.c.bf16 %v1265, %v1263
    %v1331 = vpack.c.bf16 %v1270, %v1268
    %v1332 = vpack.c.bf16 %v1275, %v1273
    %v1333 = vpack.c.bf16 %v1280, %v1278
    %v1334 = vpack.c.bf16 %v1285, %v1283
    %v1335 = vpack.c.bf16 %v1290, %v1288
    %v1336 = vpack.c.bf16 %v1295, %v1293
    %v1337 = vpack.c.bf16 %v1300, %v1298
    %v1338 = vpack.c.bf16 %v1305, %v1303
    %v1339 = vpack.c.bf16 %v1310, %v1308
    %v1340 = vpack.c.bf16 %v1315, %v1313
    %v1341 = vpack.c.bf16 %v1320, %v1318
    %v1342 = vpack.c.bf16 %v1325, %v1323
    %v1343 = vld [vmem:[%s5] sm:$0x1]
    %v1345 = vperm.slane %v1343, 0
    %1347 = vmatpush.bf16.msra.mxu0 %v1334
    %1348 = vmatpush.bf16.msra.mxu0 %v1333
    %1349 = vmatpush.bf16.msra.mxu0 %v1332
    %1350 = vmatpush.bf16.msra.mxu0 %v1331
    %1351 = vmatpush.bf16.msra.mxu0 %v1330
    %1352 = vmatpush.bf16.msra.mxu0 %v1329
    %1353 = vmatpush.bf16.msra.mxu0 %v1328
    %1354 = vmatpush.bf16.msra.mxu0 %v1327
    %1355 = vmatmul.bf16.gmra.mxu0 %v436
    %v1356 = vpop.f32.mrf.mxu0
    %v1357 = vadd.f32 %v1345, %v1356
    %v1358 = vpop.f32.mrf.mxu0
    %v1359 = vadd.f32 %v1345, %v1358
    %1360 = vmatmul.bf16.gmra.mxu0 %v438
    %v1361 = vpop.f32.mrf.mxu0
    %v1362 = vadd.f32 %v1345, %v1361
    %v1363 = vpop.f32.mrf.mxu0
    %v1364 = vadd.f32 %v1345, %v1363
    %1365 = vmatmul.bf16.gmra.mxu0 %v440
    %v1366 = vpop.f32.mrf.mxu0
    %v1367 = vadd.f32 %v1345, %v1366
    %v1368 = vpop.f32.mrf.mxu0
    %v1369 = vadd.f32 %v1345, %v1368
    %1370 = vmatmul.bf16.gmra.mxu0 %v442
    %v1371 = vpop.f32.mrf.mxu0
    %v1372 = vadd.f32 %v1345, %v1371
    %v1373 = vpop.f32.mrf.mxu0
    %v1374 = vadd.f32 %v1345, %v1373
    %1375 = vmatmul.bf16.gmra.mxu0 %v444
    %v1376 = vpop.f32.mrf.mxu0
    %v1377 = vadd.f32 %v1345, %v1376
    %v1378 = vpop.f32.mrf.mxu0
    %v1379 = vadd.f32 %v1345, %v1378
    %1380 = vmatmul.bf16.gmra.mxu0 %v446
    %v1381 = vpop.f32.mrf.mxu0
    %v1382 = vadd.f32 %v1345, %v1381
    %v1383 = vpop.f32.mrf.mxu0
    %v1384 = vadd.f32 %v1345, %v1383
    %1385 = vmatmul.bf16.gmra.mxu0 %v448
    %v1386 = vpop.f32.mrf.mxu0
    %v1387 = vadd.f32 %v1345, %v1386
    %v1388 = vpop.f32.mrf.mxu0
    %v1389 = vadd.f32 %v1345, %v1388
    %1390 = vmatmul.bf16.gmra.mxu0 %v450
    %v1391 = vpop.f32.mrf.mxu0
    %v1392 = vadd.f32 %v1345, %v1391
    %v1393 = vpop.f32.mrf.mxu0
    %v1394 = vadd.f32 %v1345, %v1393
    %1395 = vmatmul.bf16.gmra.mxu0 %v452
    %v1396 = vpop.f32.mrf.mxu0
    %v1397 = vadd.f32 %v1345, %v1396
    %v1398 = vpop.f32.mrf.mxu0
    %v1399 = vadd.f32 %v1345, %v1398
    %1400 = vmatmul.bf16.gmra.mxu0 %v454
    %v1401 = vpop.f32.mrf.mxu0
    %v1402 = vadd.f32 %v1345, %v1401
    %v1403 = vpop.f32.mrf.mxu0
    %v1404 = vadd.f32 %v1345, %v1403
    %1405 = vmatmul.bf16.gmra.mxu0 %v456
    %v1406 = vpop.f32.mrf.mxu0
    %v1407 = vadd.f32 %v1345, %v1406
    %v1408 = vpop.f32.mrf.mxu0
    %v1409 = vadd.f32 %v1345, %v1408
    %1410 = vmatmul.bf16.gmra.mxu0 %v458
    %v1411 = vpop.f32.mrf.mxu0
    %v1412 = vadd.f32 %v1345, %v1411
    %v1413 = vpop.f32.mrf.mxu0
    %v1414 = vadd.f32 %v1345, %v1413
    %1415 = vmatmul.bf16.gmra.mxu0 %v460
    %v1416 = vpop.f32.mrf.mxu0
    %v1417 = vadd.f32 %v1345, %v1416
    %v1418 = vpop.f32.mrf.mxu0
    %v1419 = vadd.f32 %v1345, %v1418
    %1420 = vmatmul.bf16.gmra.mxu0 %v462
    %v1421 = vpop.f32.mrf.mxu0
    %v1422 = vadd.f32 %v1345, %v1421
    %v1423 = vpop.f32.mrf.mxu0
    %v1424 = vadd.f32 %v1345, %v1423
    %1425 = vmatmul.bf16.gmra.mxu0 %v464
    %v1426 = vpop.f32.mrf.mxu0
    %v1427 = vadd.f32 %v1345, %v1426
    %v1428 = vpop.f32.mrf.mxu0
    %v1429 = vadd.f32 %v1345, %v1428
    %1430 = vmatmul.bf16.gmra.mxu0 %v466
    %v1431 = vpop.f32.mrf.mxu0
    %v1432 = vadd.f32 %v1345, %v1431
    %v1433 = vpop.f32.mrf.mxu0
    %v1434 = vadd.f32 %v1345, %v1433
    %1435 = vdwg.mxu0
    %1436 = vmatpush.bf16.msra.mxu0 %v1342
    %1437 = vmatpush.bf16.msra.mxu0 %v1341
    %1438 = vmatpush.bf16.msra.mxu0 %v1340
    %1439 = vmatpush.bf16.msra.mxu0 %v1339
    %1440 = vmatpush.bf16.msra.mxu0 %v1338
    %1441 = vmatpush.bf16.msra.mxu0 %v1337
    %1442 = vmatpush.bf16.msra.mxu0 %v1336
    %1443 = vmatpush.bf16.msra.mxu0 %v1335
    %1444 = vmatmul.bf16.gmra.mxu0 %v437
    %v1445 = vpop.f32.mrf.mxu0
    %v1446 = vadd.f32 %v1357, %v1445
    %v1447 = vpop.f32.mrf.mxu0
    %v1448 = vadd.f32 %v1359, %v1447
    %1449 = vmatmul.bf16.gmra.mxu0 %v439
    %v1450 = vpop.f32.mrf.mxu0
    %v1451 = vadd.f32 %v1362, %v1450
    %v1452 = vpop.f32.mrf.mxu0
    %v1453 = vadd.f32 %v1364, %v1452
    %1454 = vmatmul.bf16.gmra.mxu0 %v441
    %v1455 = vpop.f32.mrf.mxu0
    %v1456 = vadd.f32 %v1367, %v1455
    %v1457 = vpop.f32.mrf.mxu0
    %v1458 = vadd.f32 %v1369, %v1457
    %1459 = vmatmul.bf16.gmra.mxu0 %v443
    %v1460 = vpop.f32.mrf.mxu0
    %v1461 = vadd.f32 %v1372, %v1460
    %v1462 = vpop.f32.mrf.mxu0
    %v1463 = vadd.f32 %v1374, %v1462
    %1464 = vmatmul.bf16.gmra.mxu0 %v445
    %v1465 = vpop.f32.mrf.mxu0
    %v1466 = vadd.f32 %v1377, %v1465
    %v1467 = vpop.f32.mrf.mxu0
    %v1468 = vadd.f32 %v1379, %v1467
    %1469 = vmatmul.bf16.gmra.mxu0 %v447
    %v1470 = vpop.f32.mrf.mxu0
    %v1471 = vadd.f32 %v1382, %v1470
    %v1472 = vpop.f32.mrf.mxu0
    %v1473 = vadd.f32 %v1384, %v1472
    %1474 = vmatmul.bf16.gmra.mxu0 %v449
    %v1475 = vpop.f32.mrf.mxu0
    %v1476 = vadd.f32 %v1387, %v1475
    %v1477 = vpop.f32.mrf.mxu0
    %v1478 = vadd.f32 %v1389, %v1477
    %1479 = vmatmul.bf16.gmra.mxu0 %v451
    %v1480 = vpop.f32.mrf.mxu0
    %v1481 = vadd.f32 %v1392, %v1480
    %v1482 = vpop.f32.mrf.mxu0
    %v1483 = vadd.f32 %v1394, %v1482
    %1484 = vmatmul.bf16.gmra.mxu0 %v453
    %v1485 = vpop.f32.mrf.mxu0
    %v1486 = vadd.f32 %v1397, %v1485
    %v1487 = vpop.f32.mrf.mxu0
    %v1488 = vadd.f32 %v1399, %v1487
    %1489 = vmatmul.bf16.gmra.mxu0 %v455
    %v1490 = vpop.f32.mrf.mxu0
    %v1491 = vadd.f32 %v1402, %v1490
    %v1492 = vpop.f32.mrf.mxu0
    %v1493 = vadd.f32 %v1404, %v1492
    %1494 = vmatmul.bf16.gmra.mxu0 %v457
    %v1495 = vpop.f32.mrf.mxu0
    %v1496 = vadd.f32 %v1407, %v1495
    %v1497 = vpop.f32.mrf.mxu0
    %v1498 = vadd.f32 %v1409, %v1497
    %1499 = vmatmul.bf16.gmra.mxu0 %v459
    %v1500 = vpop.f32.mrf.mxu0
    %v1501 = vadd.f32 %v1412, %v1500
    %v1502 = vpop.f32.mrf.mxu0
    %v1503 = vadd.f32 %v1414, %v1502
    %1504 = vmatmul.bf16.gmra.mxu0 %v461
    %v1505 = vpop.f32.mrf.mxu0
    %v1506 = vadd.f32 %v1417, %v1505
    %v1507 = vpop.f32.mrf.mxu0
    %v1508 = vadd.f32 %v1419, %v1507
    %1509 = vmatmul.bf16.gmra.mxu0 %v463
    %v1510 = vpop.f32.mrf.mxu0
    %v1511 = vadd.f32 %v1422, %v1510
    %v1512 = vpop.f32.mrf.mxu0
    %v1513 = vadd.f32 %v1424, %v1512
    %1514 = vmatmul.bf16.gmra.mxu0 %v465
    %v1515 = vpop.f32.mrf.mxu0
    %v1516 = vadd.f32 %v1427, %v1515
    %v1517 = vpop.f32.mrf.mxu0
    %v1518 = vadd.f32 %v1429, %v1517
    %1519 = vmatmul.bf16.gmra.mxu0 %v467
    %v1520 = vpop.f32.mrf.mxu0
    %v1521 = vadd.f32 %v1432, %v1520
    %v1522 = vpop.f32.mrf.mxu0
    %v1523 = vadd.f32 %v1434, %v1522
    %1524 = vdwg.mxu0
    %v1525 = vadd.f32 %v1446, %v87
    %v1526 = vadd.f32 %v1448, %v88
    %v1527 = vadd.f32 %v1451, %v89
    %v1528 = vadd.f32 %v1453, %v90
    %v1529 = vadd.f32 %v1456, %v91
    %v1530 = vadd.f32 %v1458, %v92
    %v1531 = vadd.f32 %v1461, %v93
    %v1532 = vadd.f32 %v1463, %v94
    %v1533 = vadd.f32 %v1466, %v95
    %v1534 = vadd.f32 %v1468, %v96
    %v1535 = vadd.f32 %v1471, %v97
    %v1536 = vadd.f32 %v1473, %v98
    %v1537 = vadd.f32 %v1476, %v99
    %v1538 = vadd.f32 %v1478, %v100
    %v1539 = vadd.f32 %v1481, %v101
    %v1540 = vadd.f32 %v1483, %v102
    %v1541 = vadd.f32 %v1486, %v103
    %v1542 = vadd.f32 %v1488, %v104
    %v1543 = vadd.f32 %v1491, %v105
    %v1544 = vadd.f32 %v1493, %v106
    %v1545 = vadd.f32 %v1496, %v107
    %v1546 = vadd.f32 %v1498, %v108
    %v1547 = vadd.f32 %v1501, %v109
    %v1548 = vadd.f32 %v1503, %v110
    %v1549 = vadd.f32 %v1506, %v111
    %v1550 = vadd.f32 %v1508, %v112
    %v1551 = vadd.f32 %v1511, %v113
    %v1552 = vadd.f32 %v1513, %v114
    %v1553 = vadd.f32 %v1516, %v115
    %v1554 = vadd.f32 %v1518, %v116
    %v1555 = vadd.f32 %v1521, %v117
    %v1556 = vadd.f32 %v1523, %v118
    %1557 = vst [vmem:[#allocation10] sm:$0xff] %v1525
    %1558 = vst [vmem:[#allocation10 + $0x8] sm:$0xff] %v1526
    %1559 = vst [vmem:[#allocation10 + $0x10] sm:$0xff] %v1527
    %1560 = vst [vmem:[#allocation10 + $0x18] sm:$0xff] %v1528
    %1561 = vst [vmem:[#allocation10 + $0x20] sm:$0xff] %v1529
    %1562 = vst [vmem:[#allocation10 + $0x28] sm:$0xff] %v1530
    %1563 = vst [vmem:[#allocation10 + $0x30] sm:$0xff] %v1531
    %1564 = vst [vmem:[#allocation10 + $0x38] sm:$0xff] %v1532
    %1565 = vst [vmem:[#allocation10 + $0x40] sm:$0xff] %v1533
    %1566 = vst [vmem:[#allocation10 + $0x48] sm:$0xff] %v1534
    %1567 = vst [vmem:[#allocation10 + $0x50] sm:$0xff] %v1535
    %1568 = vst [vmem:[#allocation10 + $0x58] sm:$0xff] %v1536
    %1569 = vst [vmem:[#allocation10 + $0x60] sm:$0xff] %v1537
    %1570 = vst [vmem:[#allocation10 + $0x68] sm:$0xff] %v1538
    %1571 = vst [vmem:[#allocation10 + $0x70] sm:$0xff] %v1539
    %1572 = vst [vmem:[#allocation10 + $0x78] sm:$0xff] %v1540
    %1573 = vst [vmem:[#allocation10 + $0x80] sm:$0xff] %v1541
    %1574 = vst [vmem:[#allocation10 + $0x88] sm:$0xff] %v1542
    %1575 = vst [vmem:[#allocation10 + $0x90] sm:$0xff] %v1543
    %1576 = vst [vmem:[#allocation10 + $0x98] sm:$0xff] %v1544
    %1577 = vst [vmem:[#allocation10 + $0xa0] sm:$0xff] %v1545
    %1578 = vst [vmem:[#allocation10 + $0xa8] sm:$0xff] %v1546
    %1579 = vst [vmem:[#allocation10 + $0xb0] sm:$0xff] %v1547
    %1580 = vst [vmem:[#allocation10 + $0xb8] sm:$0xff] %v1548
    %1581 = vst [vmem:[#allocation10 + $0xc0] sm:$0xff] %v1549
    %1582 = vst [vmem:[#allocation10 + $0xc8] sm:$0xff] %v1550
    %1583 = vst [vmem:[#allocation10 + $0xd0] sm:$0xff] %v1551
    %1584 = vst [vmem:[#allocation10 + $0xd8] sm:$0xff] %v1552
    %1585 = vst [vmem:[#allocation10 + $0xe0] sm:$0xff] %v1553
    %1586 = vst [vmem:[#allocation10 + $0xe8] sm:$0xff] %v1554
    %1587 = vst [vmem:[#allocation10 + $0xf0] sm:$0xff] %v1555
    %1588 = vst [vmem:[#allocation10 + $0xf8] sm:$0xff] %v1556
    // Predicated region
    $region42: #{tpu_custom_call.1} parent=1 // pred_check
      _
    $region43: #{tpu_custom_call.1} parent=1 // pred_check_branch
      %1590 = sbr.rel (0) target = $region45
    $region44: #{tpu_custom_call.1} parent=1 // pred_region
      %1592 = vsyncadd [#allocation4], 0
      %s1593 = sshll.u32 [#allocation10], 4
      %s1594 = int_to_ptr.vmem [resolvable:$true] %s1593
      %s1595 = sshll.u32 %s6, 4
      %s1596 = int_to_ptr.hbm [resolvable:$true] %s1595
      %1601 = dma.vmem_to_hbm [thread:$0]  %s1594, 4096, %s1596, [#allocation4], 128, 128, 8
    $region45: #{tpu_custom_call.1} parent=1 // pred_fallthru
      _
    // Predicated region
    $region46: #{tpu_custom_call.1} parent=1 // pred_check
      _
    $region47: #{tpu_custom_call.1} parent=1 // pred_check_branch
      %1603 = sbr.rel (0) target = $region49
    $region48: #{tpu_custom_call.1} parent=1 // pred_region
      %1605 = dma.done [#allocation4], 4096
    $region49: #{tpu_custom_call.1} parent=1 // pred_fallthru
      _
    %1606 = vsyncpa [#allocation3], 1
    %1607 = vsyncpa [#allocation6], 1
    %1608 = vsyncpa [#allocation9], 1
    %1609 = vsyncpa [#allocation4], 1

</llo_original>
